<compile_context>
chip_gen: v7x
topology: tpu7x:2x2x1
jax: 0.10.0
libtpu: 0.0.40
codegen_flags: <defaults>
</compile_context>

<pallas_src>
import jax
import jax.numpy as jnp
from jax.experimental import pallas as pl
from jax.experimental.pallas import tpu as pltpu

EPS = 1e-5


def _make_kernel(*, num_layers, num_mid, m, tile_m, n_tiles, compute_dtype):
    L = num_layers
    ragged = (m % tile_m) != 0
    single_tile = n_tiles == 1
    cd = compute_dtype

    def kernel(*refs):
        it = iter(refs)
        x_ref = next(it)
        w0_ref = next(it)
        wmid_ref = next(it) if num_mid > 0 else None
        gamma_ref = next(it)
        beta_ref = next(it)
        wout_ref = next(it)
        bout_ref = next(it)
        out_ref = next(it)
        act_ref = next(it)
        ssum_ref = next(it)
        ssq_ref = next(it)
        scale_ref = next(it)
        shift_ref = next(it)

        l = pl.program_id(0)
        j = pl.program_id(1)
        col0 = j * tile_m
        if tile_m % 128 == 0:
            col0 = pl.multiple_of(col0, 128)
        cols = slice(None) if single_tile else pl.ds(col0, tile_m)

        def reset_stats():
            ssum_ref[...] = jnp.zeros_like(ssum_ref)
            ssq_ref[...] = jnp.zeros_like(ssq_ref)

        def accumulate_stats(h):
            # h: (hidden, tile_m) f32, post-ReLU. Padded columns (ragged last
            # tile) must not contribute to the batch statistics.
            # TODO(synk): for very large M switch to mean-shifted partial sums
            # to avoid one-pass-variance cancellation.
            if ragged:
                col = col0 + jax.lax.broadcasted_iota(jnp.int32, (1, tile_m), 1)
                h = jnp.where(col < m, h, 0.0)
            ssum_ref[...] += jnp.sum(h, axis=1, keepdims=True)
            ssq_ref[...] += jnp.sum(h * h, axis=1, keepdims=True)

        def finalize_prev_bn(k):
            # Pass k consumes BN(hidden layer k-1): stats -> scale/shift (f32).
            inv_m = 1.0 / m
            mean = ssum_ref[...] * inv_m                          # (hidden, 1)
            var = jnp.maximum(ssq_ref[...] * inv_m - mean * mean, 0.0)
            inv_std = jax.lax.rsqrt(var + EPS)
            sc = gamma_ref[k - 1] * inv_std                       # (hidden, 1)
            scale_ref[...] = sc
            shift_ref[...] = beta_ref[k - 1] - mean * sc

        def normalized_prev_tile():
            a = act_ref[:, cols].astype(jnp.float32)
            return (a * scale_ref[...] + shift_ref[...]).astype(cd)

        # ---- pass 0: Linear(no bias) -> ReLU on the streamed native x tile ----
        @pl.when(l == 0)
        def _first():
            xb = x_ref[...]                                        # (tile_m, d)
            if ragged:
                row = col0 + jax.lax.broadcasted_iota(jnp.int32, (tile_m, 1), 0)
                xb = jnp.where(row < m, xb, jnp.zeros_like(xb))
            h = jax.lax.dot_general(
                w0_ref[...].astype(cd), xb.astype(cd),
                (((1,), (1,)), ((), ())),
                preferred_element_type=jnp.float32)                # (hidden, tile_m)
            h = jnp.maximum(h, 0.0)
            act_ref[:, cols] = h.astype(act_ref.dtype)

            @pl.when(j == 0)
            def _():
                reset_stats()

            accumulate_stats(h)

        # ---- middle passes: BN(prev) -> Linear(no bias) -> ReLU, VMEM only ----
        for k in range(1, L - 1):
            @pl.when(l == k)
            def _mid(k=k):
                @pl.when(j == 0)
                def _():
                    finalize_prev_bn(k)
                    reset_stats()

                a = normalized_prev_tile()                         # (hidden, tile_m)
                h = jnp.dot(wmid_ref[k - 1].astype(cd), a,
                            preferred_element_type=jnp.float32)
                h = jnp.maximum(h, 0.0)
                act_ref[:, cols] = h.astype(act_ref.dtype)
                accumulate_stats(h)

        # ---- last pass: BN(prev) -> Linear(+bias), native (tile_m, node_dim) out ----
        @pl.when(l == L - 1)
        def _last():
            @pl.when(j == 0)
            def _():
                finalize_prev_bn(L - 1)

            a = normalized_prev_tile()                             # (hidden, tile_m)
            o = jax.lax.dot_general(
                a, wout_ref[...].astype(cd),
                (((0,), (1,)), ((), ())),
                preferred_element_type=jnp.float32)                # (tile_m, node_dim)
            out_ref[...] = (o + bout_ref[...]).astype(out_ref.dtype)

    return kernel


def _vmem_limit_bytes(required):
    cap = 64 * 1024 * 1024
    try:
        info = pltpu.get_tpu_info()
        cap = int(getattr(info, "vmem_capacity_bytes", cap)) or cap
    except Exception:
        pass
    budget = (cap * 3) // 4          # v7x: ~48 MiB; v5e/v6e: ~96 MiB headroom
    return int(min(max(2 * required, 32 * 1024 * 1024), budget))


def init_params(key, node_latent_dim, hidden_dim, node_dim, num_layers):
    """Parameters in PyTorch Linear layout (out_dim, in_dim); BN affine as (hidden,)."""
    keys = jax.random.split(key, 3 * num_layers)
    hidden_layers = []
    for i in range(num_layers - 1):
        in_dim = hidden_dim if i > 0 else node_latent_dim
        w = jax.random.normal(
            keys[3 * i], (hidden_dim, in_dim), jnp.float32
        ) / jnp.sqrt(jnp.float32(in_dim))
        gamma = 1.0 + 0.1 * jax.random.normal(keys[3 * i + 1], (hidden_dim,), jnp.float32)
        beta = 0.1 * jax.random.normal(keys[3 * i + 2], (hidden_dim,), jnp.float32)
        hidden_layers.append((w, gamma, beta))
    w_out = jax.random.normal(
        keys[-2], (node_dim, hidden_dim), jnp.float32
    ) / jnp.sqrt(jnp.float32(hidden_dim))
    b_out = jax.random.uniform(
        keys[-1], (node_dim, 1), jnp.float32, minval=-0.1, maxval=0.1
    )
    return {"hidden_layers": hidden_layers, "w_out": w_out, "b_out": b_out}


def node_decoder(x, params, *, compute_dtype=None, tile_m=None):
    """Pallas-backed forward pass. x: (b, n, d) or (b, s, n, d)."""
    if x.ndim == 3:
        x = x[:, None]                       # unsqueeze seq dim (PyTorch forward)
    b, s, n, d = x.shape
    m = b * s * n
    out_dtype = x.dtype
    cd = jnp.dtype(compute_dtype) if compute_dtype is not None else jnp.dtype(out_dtype)

    hidden_layers = params["hidden_layers"]
    num_hidden = len(hidden_layers)
    assert num_hidden >= 1, "need num_layers >= 2"
    L = num_hidden + 1
    num_mid = num_hidden - 1
    hidden_dim = hidden_layers[0][0].shape[0]
    node_dim = params["w_out"].shape[0]

    # Small parameter tensors: kept f32 and VMEM-resident across the whole grid
    # (constant index_maps => fetched once). Casting to compute_dtype happens
    # in-kernel, right at the MXU operand, so the fold/normalize math stays f32.
    w0 = hidden_layers[0][0].astype(jnp.float32)                                 # (hidden, d)
    gammas = jnp.stack([g for (_, g, _) in hidden_layers]).astype(jnp.float32)[:, :, None]
    betas = jnp.stack([bt for (_, _, bt) in hidden_layers]).astype(jnp.float32)[:, :, None]
    w_out = params["w_out"].astype(jnp.float32)                                  # (node_dim, hidden)
    b_out = params["b_out"].astype(jnp.float32).reshape(1, node_dim)             # (1, node_dim)
    wmid = (jnp.stack([w for (w, _, _) in hidden_layers[1:]]).astype(jnp.float32)
            if num_mid > 0 else None)                                            # (num_mid, h, h)

    x2 = x.reshape(m, d)                     # free row-major metadata reshape, no HBM pass

    # Tile only the streamed M axis; single exact tile for modest M, big lane
    # tiles otherwise (amortizes the ~0.35us/step grid overhead).
    if tile_m is None:
        tile_m = m if m <= 8192 else 4096
    tile_m = int(tile_m)
    if tile_m >= m:
        tile_m = m
    elif tile_m % 8 != 0:
        tile_m = -(-tile_m // 8) * 8
    n_tiles = -(-m // tile_m)
    m_pad = n_tiles * tile_m

    act_bytes = hidden_dim * m_pad * cd.itemsize
    io_bytes = 2 * tile_m * (d * x.dtype.itemsize + node_dim * jnp.dtype(out_dtype).itemsize)
    par_bytes = 4 * (w0.size + (wmid.size if wmid is not None else 0)
                     + gammas.size + betas.size + w_out.size + b_out.size)
    vmem_limit = _vmem_limit_bytes(act_bytes + io_bytes + par_bytes + (1 << 20))

    kernel = _make_kernel(num_layers=L, num_mid=num_mid, m=m, tile_m=tile_m,
                          n_tiles=n_tiles, compute_dtype=cd)

    last = L - 1
    in_specs = [
        # x streams only during pass 0; its block index is pinned afterwards so
        # the DMA is elided on later passes.
        pl.BlockSpec((tile_m, d), lambda l, j: (jnp.where(l == 0, j, 0), 0)),
        pl.BlockSpec((hidden_dim, d), lambda l, j: (0, 0)),
    ]
    inputs = [x2, w0]
    if num_mid > 0:
        in_specs.append(pl.BlockSpec((num_mid, hidden_dim, hidden_dim),
                                     lambda l, j: (0, 0, 0)))
        inputs.append(wmid)
    in_specs += [
        pl.BlockSpec((num_hidden, hidden_dim, 1), lambda l, j: (0, 0, 0)),
        pl.BlockSpec((num_hidden, hidden_dim, 1), lambda l, j: (0, 0, 0)),
        pl.BlockSpec((node_dim, hidden_dim), lambda l, j: (0, 0)),
        pl.BlockSpec((1, node_dim), lambda l, j: (0, 0)),
    ]
    inputs += [gammas, betas, w_out, b_out]

    # Output blocks only advance during the final pass => each HBM block is
    # written back exactly once, straight in the native (M, node_dim) layout.
    out_spec = pl.BlockSpec((tile_m, node_dim),
                            lambda l, j: (jnp.where(l == last, j, 0), 0))

    flops = 2 * m * hidden_dim * (d + num_mid * hidden_dim + node_dim) \
        + 6 * m * hidden_dim * num_hidden
    bytes_accessed = int(x2.size * x2.dtype.itemsize
                         + m * node_dim * jnp.dtype(out_dtype).itemsize
                         + par_bytes)
    cost = pl.CostEstimate(flops=int(flops),
                           transcendentals=int(num_hidden * hidden_dim),
                           bytes_accessed=bytes_accessed)

    out2 = pl.pallas_call(
        kernel,
        out_shape=jax.ShapeDtypeStruct((m, node_dim), out_dtype),
        grid=(L, n_tiles),
        in_specs=in_specs,
        out_specs=out_spec,
        scratch_shapes=[
            pltpu.VMEM((hidden_dim, m_pad), cd),       # resident activation slab
            pltpu.VMEM((hidden_dim, 1), jnp.float32),  # BN running sum
            pltpu.VMEM((hidden_dim, 1), jnp.float32),  # BN running sum of squares
            pltpu.VMEM((hidden_dim, 1), jnp.float32),  # BN scale of previous layer
            pltpu.VMEM((hidden_dim, 1), jnp.float32),  # BN shift of previous layer
        ],
        compiler_params=pltpu.CompilerParams(
            dimension_semantics=("arbitrary", "arbitrary"),
            vmem_limit_bytes=vmem_limit,
        ),
        cost_estimate=cost,
    )(*inputs)

    return out2.reshape(b, s, n, node_dim)


def node_decoder_ref(x, params):
    """Pure-JAX reference mirroring the PyTorch module (training-mode BatchNorm)."""
    if x.ndim == 3:
        x = x[:, None]
    b, s, n, d = x.shape
    with jax.default_matmul_precision("float32"):
        h = x.reshape(b * s * n, d).astype(jnp.float32)
        for (w, gamma, beta) in params["hidden_layers"]:
            h = jnp.maximum(h @ w.T, 0.0)
            mean = jnp.mean(h, axis=0, keepdims=True)
            var = jnp.mean((h - mean) ** 2, axis=0, keepdims=True)
            h = (h - mean) / jnp.sqrt(var + EPS) * gamma[None, :] + beta[None, :]
        out = h @ params["w_out"].T + params["b_out"][:, 0][None, :]
    return out.reshape(b, s, n, -1)


if __name__ == "__main__":
    node_latent_dim = 16
    hidden_dim = 32
    node_dim = 8
    num_layers = 3
    b, s, n = 2, 2, 64                     # M = 256 -> one VMEM-resident tile

    key = jax.random.PRNGKey(0)
    k_x, k_p, k_x3, k_x4 = jax.random.split(key, 4)
    x = jax.random.normal(k_x, (b, s, n, node_latent_dim), jnp.float32)
    params = init_params(k_p, node_latent_dim, hidden_dim, node_dim, num_layers)

    y = jax.block_until_ready(node_decoder(x, params))
    y_ref = node_decoder_ref(x, params)
    assert y.shape == (b, s, n, node_dim), y.shape
    assert jnp.allclose(y, y_ref, atol=1e-2, rtol=1e-2), float(jnp.max(jnp.abs(y - y_ref)))

    # 3-D input path (M = 60, single exact tile; exercises the unsqueeze path).
    x3 = jax.random.normal(k_x3, (3, 20, node_latent_dim), jnp.float32)
    y3 = jax.block_until_ready(node_decoder(x3, params))
    y3_ref = node_decoder_ref(x3, params)
    assert y3.shape == (3, 1, 20, node_dim), y3.shape
    assert jnp.allclose(y3, y3_ref, atol=1e-2, rtol=1e-2), float(jnp.max(jnp.abs(y3 - y3_ref)))

    # Multi-tile + ragged path: M = 280 with tile_m=128 -> 3 tiles, partial last
    # tile exercises the in-kernel masks and partial in/out blocks.
    x4 = jax.random.normal(k_x4, (2, 2, 70, node_latent_dim), jnp.float32)
    y4 = jax.block_until_ready(node_decoder(x4, params, tile_m=128))
    y4_ref = node_decoder_ref(x4, params)
    assert y4.shape == (2, 2, 70, node_dim), y4.shape
    assert jnp.allclose(y4, y4_ref, atol=1e-2, rtol=1e-2), float(jnp.max(jnp.abs(y4 - y4_ref)))

    # bf16 MXU operands + bf16 resident slab (beneficial on v5e/v6e/v7x alike);
    # BN statistics and normalization stay f32.
    y_bf16 = jax.block_until_ready(node_decoder(x, params, compute_dtype=jnp.bfloat16))
    assert y_bf16.shape == (b, s, n, node_dim)
    assert bool(jnp.all(jnp.isfinite(y_bf16.astype(jnp.float32))))
    assert float(jnp.max(jnp.abs(y_bf16.astype(jnp.float32) - y_ref))) < 0.25

    print("KERNEL_OK")
</pallas_src>

<mosaic_0001>
module attributes {stable_mosaic.version = 11 : i64} {
  func.func @kernel(%arg0: i32, %arg1: i32, %arg2: memref<256x16xf32, #tpu.memory_space<vmem>>, %arg3: memref<32x16xf32, #tpu.memory_space<vmem>>, %arg4: memref<1x32x32xf32, #tpu.memory_space<vmem>>, %arg5: memref<2x32x1xf32, #tpu.memory_space<vmem>>, %arg6: memref<2x32x1xf32, #tpu.memory_space<vmem>>, %arg7: memref<8x32xf32, #tpu.memory_space<vmem>>, %arg8: memref<1x8xf32, #tpu.memory_space<vmem>>, %arg9: memref<256x8xf32, #tpu.memory_space<vmem>>, %arg10: memref<32x256xf32, #tpu.memory_space<vmem>>, %arg11: memref<32x1xf32, #tpu.memory_space<vmem>>, %arg12: memref<32x1xf32, #tpu.memory_space<vmem>>, %arg13: memref<32x1xf32, #tpu.memory_space<vmem>>, %arg14: memref<32x1xf32, #tpu.memory_space<vmem>>) attributes {dimension_semantics = [#tpu.dimension_semantics<arbitrary>, #tpu.dimension_semantics<arbitrary>], iteration_bounds = array<i64: 3, 1>, scalar_prefetch = 0 : i64, scratch_operands = 5 : i64, tpu.core_type = #tpu.core_type<tc>, window_params = [{transform_indices = @transform_0, window_bounds = array<i64: 256, 16>}, {pipeline_mode = #tpu.pipeline_mode<synchronous>, transform_indices = @transform_1, window_bounds = array<i64: 32, 16>}, {pipeline_mode = #tpu.pipeline_mode<synchronous>, transform_indices = @transform_2, window_bounds = array<i64: 1, 32, 32>}, {pipeline_mode = #tpu.pipeline_mode<synchronous>, transform_indices = @transform_3, window_bounds = array<i64: 2, 32, 1>}, {pipeline_mode = #tpu.pipeline_mode<synchronous>, transform_indices = @transform_4, window_bounds = array<i64: 2, 32, 1>}, {pipeline_mode = #tpu.pipeline_mode<synchronous>, transform_indices = @transform_5, window_bounds = array<i64: 8, 32>}, {pipeline_mode = #tpu.pipeline_mode<synchronous>, transform_indices = @transform_6, window_bounds = array<i64: 1, 8>}, {transform_indices = @transform_7, window_bounds = array<i64: 256, 8>}]} {
    %c0_i32 = arith.constant 0 : i32
    %0 = arith.cmpi eq, %arg0, %c0_i32 : i32
    %1 = arith.extui %0 : i1 to i32
    %c0_i32_0 = arith.constant 0 : i32
    %2 = arith.cmpi ne, %1, %c0_i32_0 : i32
    scf.if %2 {
      %c0 = arith.constant 0 : index
      %c0_3 = arith.constant 0 : index
      %9 = vector.load %arg2[%c0, %c0_3] : memref<256x16xf32, #tpu.memory_space<vmem>>, vector<256x16xf32>
      %c0_4 = arith.constant 0 : index
      %c0_5 = arith.constant 0 : index
      %10 = vector.load %arg3[%c0_4, %c0_5] : memref<32x16xf32, #tpu.memory_space<vmem>>, vector<32x16xf32>
      %cst = arith.constant dense<0.000000e+00> : vector<32x256xf32>
      %11 = tpu.matmul %10, %9, %cst {dimension_numbers = #tpu.dot_dimension_numbers<[1], [1], [0], [0], [0, 0, 1, 0], [], []>} : vector<32x16xf32>, vector<256x16xf32>, vector<32x256xf32> -> vector<32x256xf32>
      %cst_6 = arith.constant 0.000000e+00 : f32
      %12 = vector.broadcast %cst_6 : f32 to vector<32x256xf32>
      %13 = arith.maximumf %11, %12 : vector<32x256xf32>
      %c0_7 = arith.constant 0 : index
      %c0_8 = arith.constant 0 : index
      %14 = vector.load %arg10[%c0_7, %c0_8] : memref<32x256xf32, #tpu.memory_space<vmem>>, vector<32x256xf32>
      tpu.vector_store %arg10[%c0_7, %c0_8], %13 {strides = array<i32>} : memref<32x256xf32, #tpu.memory_space<vmem>>, vector<32x256xf32>,
      %c0_i32_9 = arith.constant 0 : i32
      %15 = arith.cmpi eq, %arg1, %c0_i32_9 : i32
      %16 = arith.extui %15 : i1 to i32
      %c0_i32_10 = arith.constant 0 : i32
      %17 = arith.cmpi ne, %16, %c0_i32_10 : i32
      scf.if %17 {
        %cst_21 = arith.constant 0.000000e+00 : f32
        %29 = vector.broadcast %cst_21 : f32 to vector<32x1xf32>
        %c0_22 = arith.constant 0 : index
        %c0_23 = arith.constant 0 : index
        %30 = vector.load %arg11[%c0_22, %c0_23] : memref<32x1xf32, #tpu.memory_space<vmem>>, vector<32x1xf32>
        tpu.vector_store %arg11[%c0_22, %c0_23], %29 {strides = array<i32>} : memref<32x1xf32, #tpu.memory_space<vmem>>, vector<32x1xf32>,
        %cst_24 = arith.constant 0.000000e+00 : f32
        %31 = vector.broadcast %cst_24 : f32 to vector<32x1xf32>
        %c0_25 = arith.constant 0 : index
        %c0_26 = arith.constant 0 : index
        %32 = vector.load %arg12[%c0_25, %c0_26] : memref<32x1xf32, #tpu.memory_space<vmem>>, vector<32x1xf32>
        tpu.vector_store %arg12[%c0_25, %c0_26], %31 {strides = array<i32>} : memref<32x1xf32, #tpu.memory_space<vmem>>, vector<32x1xf32>,
      } else {
      }
      %c0_11 = arith.constant 0 : index
      %c0_12 = arith.constant 0 : index
      %18 = vector.load %arg11[%c0_11, %c0_12] : memref<32x1xf32, #tpu.memory_space<vmem>>, vector<32x1xf32>
      %cst_13 = arith.constant dense<0.000000e+00> : vector<32xf32>
      %19 = vector.multi_reduction <add>, %13, %cst_13 [1] : vector<32x256xf32> to vector<32xf32>
      %20 = vector.shape_cast %19 : vector<32xf32> to vector<32x1xf32>
      %21 = arith.addf %18, %20 : vector<32x1xf32>
      %c0_14 = arith.constant 0 : index
      %c0_15 = arith.constant 0 : index
      %22 = vector.load %arg11[%c0_14, %c0_15] : memref<32x1xf32, #tpu.memory_space<vmem>>, vector<32x1xf32>
      tpu.vector_store %arg11[%c0_14, %c0_15], %21 {strides = array<i32>} : memref<32x1xf32, #tpu.memory_space<vmem>>, vector<32x1xf32>,
      %c0_16 = arith.constant 0 : index
      %c0_17 = arith.constant 0 : index
      %23 = vector.load %arg12[%c0_16, %c0_17] : memref<32x1xf32, #tpu.memory_space<vmem>>, vector<32x1xf32>
      %24 = arith.mulf %13, %13 : vector<32x256xf32>
      %cst_18 = arith.constant dense<0.000000e+00> : vector<32xf32>
      %25 = vector.multi_reduction <add>, %24, %cst_18 [1] : vector<32x256xf32> to vector<32xf32>
      %26 = vector.shape_cast %25 : vector<32xf32> to vector<32x1xf32>
      %27 = arith.addf %23, %26 : vector<32x1xf32>
      %c0_19 = arith.constant 0 : index
      %c0_20 = arith.constant 0 : index
      %28 = vector.load %arg12[%c0_19, %c0_20] : memref<32x1xf32, #tpu.memory_space<vmem>>, vector<32x1xf32>
      tpu.vector_store %arg12[%c0_19, %c0_20], %27 {strides = array<i32>} : memref<32x1xf32, #tpu.memory_space<vmem>>, vector<32x1xf32>,
    } else {
    }
    %c1_i32 = arith.constant 1 : i32
    %3 = arith.cmpi eq, %arg0, %c1_i32 : i32
    %4 = arith.extui %3 : i1 to i32
    %c0_i32_1 = arith.constant 0 : i32
    %5 = arith.cmpi ne, %4, %c0_i32_1 : i32
    scf.if %5 {
      %c0_i32_3 = arith.constant 0 : i32
      %9 = arith.cmpi eq, %arg1, %c0_i32_3 : i32
      %10 = arith.extui %9 : i1 to i32
      %c0_i32_4 = arith.constant 0 : i32
      %11 = arith.cmpi ne, %10, %c0_i32_4 : i32
      scf.if %11 {
        %c0_26 = arith.constant 0 : index
        %c0_27 = arith.constant 0 : index
        %36 = vector.load %arg11[%c0_26, %c0_27] : memref<32x1xf32, #tpu.memory_space<vmem>>, vector<32x1xf32>
        %cst_28 = arith.constant 3.906250e-03 : f32
        %37 = vector.broadcast %cst_28 : f32 to vector<32x1xf32>
        %38 = arith.mulf %36, %37 : vector<32x1xf32>
        %c0_29 = arith.constant 0 : index
        %c0_30 = arith.constant 0 : index
        %39 = vector.load %arg12[%c0_29, %c0_30] : memref<32x1xf32, #tpu.memory_space<vmem>>, vector<32x1xf32>
        %cst_31 = arith.constant 3.906250e-03 : f32
        %40 = vector.broadcast %cst_31 : f32 to vector<32x1xf32>
        %41 = arith.mulf %39, %40 : vector<32x1xf32>
        %42 = arith.mulf %38, %38 : vector<32x1xf32>
        %43 = arith.subf %41, %42 : vector<32x1xf32>
        %cst_32 = arith.constant 0.000000e+00 : f32
        %44 = vector.broadcast %cst_32 : f32 to vector<32x1xf32>
        %45 = arith.maximumf %43, %44 : vector<32x1xf32>
        %cst_33 = arith.constant 9.99999974E-6 : f32
        %46 = vector.broadcast %cst_33 : f32 to vector<32x1xf32>
        %47 = arith.addf %45, %46 : vector<32x1xf32>
        %48 = math.rsqrt %47 : vector<32x1xf32>
        %c0_34 = arith.constant 0 : index
        %c0_35 = arith.constant 0 : index
        %c0_36 = arith.constant 0 : index
        %49 = vector.load %arg5[%c0_34, %c0_35, %c0_36] : memref<2x32x1xf32, #tpu.memory_space<vmem>>, vector<1x32x1xf32>
        %50 = vector.shape_cast %49 : vector<1x32x1xf32> to vector<32x1xf32>
        %51 = arith.mulf %50, %48 : vector<32x1xf32>
        %c0_37 = arith.constant 0 : index
        %c0_38 = arith.constant 0 : index
        %52 = vector.load %arg13[%c0_37, %c0_38] : memref<32x1xf32, #tpu.memory_space<vmem>>, vector<32x1xf32>
        tpu.vector_store %arg13[%c0_37, %c0_38], %51 {strides = array<i32>} : memref<32x1xf32, #tpu.memory_space<vmem>>, vector<32x1xf32>,
        %c0_39 = arith.constant 0 : index
        %c0_40 = arith.constant 0 : index
        %c0_41 = arith.constant 0 : index
        %53 = vector.load %arg6[%c0_39, %c0_40, %c0_41] : memref<2x32x1xf32, #tpu.memory_space<vmem>>, vector<1x32x1xf32>
        %54 = vector.shape_cast %53 : vector<1x32x1xf32> to vector<32x1xf32>
        %55 = arith.mulf %38, %51 : vector<32x1xf32>
        %56 = arith.subf %54, %55 : vector<32x1xf32>
        %c0_42 = arith.constant 0 : index
        %c0_43 = arith.constant 0 : index
        %57 = vector.load %arg14[%c0_42, %c0_43] : memref<32x1xf32, #tpu.memory_space<vmem>>, vector<32x1xf32>
        tpu.vector_store %arg14[%c0_42, %c0_43], %56 {strides = array<i32>} : memref<32x1xf32, #tpu.memory_space<vmem>>, vector<32x1xf32>,
        %cst_44 = arith.constant 0.000000e+00 : f32
        %58 = vector.broadcast %cst_44 : f32 to vector<32x1xf32>
        %c0_45 = arith.constant 0 : index
        %c0_46 = arith.constant 0 : index
        %59 = vector.load %arg11[%c0_45, %c0_46] : memref<32x1xf32, #tpu.memory_space<vmem>>, vector<32x1xf32>
        tpu.vector_store %arg11[%c0_45, %c0_46], %58 {strides = array<i32>} : memref<32x1xf32, #tpu.memory_space<vmem>>, vector<32x1xf32>,
        %cst_47 = arith.constant 0.000000e+00 : f32
        %60 = vector.broadcast %cst_47 : f32 to vector<32x1xf32>
        %c0_48 = arith.constant 0 : index
        %c0_49 = arith.constant 0 : index
        %61 = vector.load %arg12[%c0_48, %c0_49] : memref<32x1xf32, #tpu.memory_space<vmem>>, vector<32x1xf32>
        tpu.vector_store %arg12[%c0_48, %c0_49], %60 {strides = array<i32>} : memref<32x1xf32, #tpu.memory_space<vmem>>, vector<32x1xf32>,
      } else {
      }
      %c0 = arith.constant 0 : index
      %c0_5 = arith.constant 0 : index
      %12 = vector.load %arg10[%c0, %c0_5] : memref<32x256xf32, #tpu.memory_space<vmem>>, vector<32x256xf32>
      %c0_6 = arith.constant 0 : index
      %c0_7 = arith.constant 0 : index
      %13 = vector.load %arg13[%c0_6, %c0_7] : memref<32x1xf32, #tpu.memory_space<vmem>>, vector<32x1xf32>
      %14 = vector.broadcast %13 : vector<32x1xf32> to vector<32x256xf32>
      %15 = arith.mulf %12, %14 : vector<32x256xf32>
      %c0_8 = arith.constant 0 : index
      %c0_9 = arith.constant 0 : index
      %16 = vector.load %arg14[%c0_8, %c0_9] : memref<32x1xf32, #tpu.memory_space<vmem>>, vector<32x1xf32>
      %17 = vector.broadcast %16 : vector<32x1xf32> to vector<32x256xf32>
      %18 = arith.addf %15, %17 : vector<32x256xf32>
      %c0_10 = arith.constant 0 : index
      %c0_11 = arith.constant 0 : index
      %c0_12 = arith.constant 0 : index
      %19 = vector.load %arg4[%c0_10, %c0_11, %c0_12] : memref<1x32x32xf32, #tpu.memory_space<vmem>>, vector<1x32x32xf32>
      %20 = vector.shape_cast %19 : vector<1x32x32xf32> to vector<32x32xf32>
      %cst = arith.constant dense<0.000000e+00> : vector<32x256xf32>
      %21 = tpu.matmul %20, %18, %cst {dimension_numbers = #tpu.dot_dimension_numbers<[1], [0], [0], [1], [0, 0, 1, 1], [], []>} : vector<32x32xf32>, vector<32x256xf32>, vector<32x256xf32> -> vector<32x256xf32>
      %cst_13 = arith.constant 0.000000e+00 : f32
      %22 = vector.broadcast %cst_13 : f32 to vector<32x256xf32>
      %23 = arith.maximumf %21, %22 : vector<32x256xf32>
      %c0_14 = arith.constant 0 : index
      %c0_15 = arith.constant 0 : index
      %24 = vector.load %arg10[%c0_14, %c0_15] : memref<32x256xf32, #tpu.memory_space<vmem>>, vector<32x256xf32>
      tpu.vector_store %arg10[%c0_14, %c0_15], %23 {strides = array<i32>} : memref<32x256xf32, #tpu.memory_space<vmem>>, vector<32x256xf32>,
      %c0_16 = arith.constant 0 : index
      %c0_17 = arith.constant 0 : index
      %25 = vector.load %arg11[%c0_16, %c0_17] : memref<32x1xf32, #tpu.memory_space<vmem>>, vector<32x1xf32>
      %cst_18 = arith.constant dense<0.000000e+00> : vector<32xf32>
      %26 = vector.multi_reduction <add>, %23, %cst_18 [1] : vector<32x256xf32> to vector<32xf32>
      %27 = vector.shape_cast %26 : vector<32xf32> to vector<32x1xf32>
      %28 = arith.addf %25, %27 : vector<32x1xf32>
      %c0_19 = arith.constant 0 : index
      %c0_20 = arith.constant 0 : index
      %29 = vector.load %arg11[%c0_19, %c0_20] : memref<32x1xf32, #tpu.memory_space<vmem>>, vector<32x1xf32>
      tpu.vector_store %arg11[%c0_19, %c0_20], %28 {strides = array<i32>} : memref<32x1xf32, #tpu.memory_space<vmem>>, vector<32x1xf32>,
      %c0_21 = arith.constant 0 : index
      %c0_22 = arith.constant 0 : index
      %30 = vector.load %arg12[%c0_21, %c0_22] : memref<32x1xf32, #tpu.memory_space<vmem>>, vector<32x1xf32>
      %31 = arith.mulf %23, %23 : vector<32x256xf32>
      %cst_23 = arith.constant dense<0.000000e+00> : vector<32xf32>
      %32 = vector.multi_reduction <add>, %31, %cst_23 [1] : vector<32x256xf32> to vector<32xf32>
      %33 = vector.shape_cast %32 : vector<32xf32> to vector<32x1xf32>
      %34 = arith.addf %30, %33 : vector<32x1xf32>
      %c0_24 = arith.constant 0 : index
      %c0_25 = arith.constant 0 : index
      %35 = vector.load %arg12[%c0_24, %c0_25] : memref<32x1xf32, #tpu.memory_space<vmem>>, vector<32x1xf32>
      tpu.vector_store %arg12[%c0_24, %c0_25], %34 {strides = array<i32>} : memref<32x1xf32, #tpu.memory_space<vmem>>, vector<32x1xf32>,
    } else {
    }
    %c2_i32 = arith.constant 2 : i32
    %6 = arith.cmpi eq, %arg0, %c2_i32 : i32
    %7 = arith.extui %6 : i1 to i32
    %c0_i32_2 = arith.constant 0 : i32
    %8 = arith.cmpi ne, %7, %c0_i32_2 : i32
    scf.if %8 {
      %c0_i32_3 = arith.constant 0 : i32
      %9 = arith.cmpi eq, %arg1, %c0_i32_3 : i32
      %10 = arith.extui %9 : i1 to i32
      %c0_i32_4 = arith.constant 0 : i32
      %11 = arith.cmpi ne, %10, %c0_i32_4 : i32
      scf.if %11 {
        %c0_16 = arith.constant 0 : index
        %c0_17 = arith.constant 0 : index
        %25 = vector.load %arg11[%c0_16, %c0_17] : memref<32x1xf32, #tpu.memory_space<vmem>>, vector<32x1xf32>
        %cst_18 = arith.constant 3.906250e-03 : f32
        %26 = vector.broadcast %cst_18 : f32 to vector<32x1xf32>
        %27 = arith.mulf %25, %26 : vector<32x1xf32>
        %c0_19 = arith.constant 0 : index
        %c0_20 = arith.constant 0 : index
        %28 = vector.load %arg12[%c0_19, %c0_20] : memref<32x1xf32, #tpu.memory_space<vmem>>, vector<32x1xf32>
        %cst_21 = arith.constant 3.906250e-03 : f32
        %29 = vector.broadcast %cst_21 : f32 to vector<32x1xf32>
        %30 = arith.mulf %28, %29 : vector<32x1xf32>
        %31 = arith.mulf %27, %27 : vector<32x1xf32>
        %32 = arith.subf %30, %31 : vector<32x1xf32>
        %cst_22 = arith.constant 0.000000e+00 : f32
        %33 = vector.broadcast %cst_22 : f32 to vector<32x1xf32>
        %34 = arith.maximumf %32, %33 : vector<32x1xf32>
        %cst_23 = arith.constant 9.99999974E-6 : f32
        %35 = vector.broadcast %cst_23 : f32 to vector<32x1xf32>
        %36 = arith.addf %34, %35 : vector<32x1xf32>
        %37 = math.rsqrt %36 : vector<32x1xf32>
        %c1 = arith.constant 1 : index
        %c0_24 = arith.constant 0 : index
        %c0_25 = arith.constant 0 : index
        %38 = vector.load %arg5[%c1, %c0_24, %c0_25] : memref<2x32x1xf32, #tpu.memory_space<vmem>>, vector<1x32x1xf32>
        %39 = vector.shape_cast %38 : vector<1x32x1xf32> to vector<32x1xf32>
        %40 = arith.mulf %39, %37 : vector<32x1xf32>
        %c0_26 = arith.constant 0 : index
        %c0_27 = arith.constant 0 : index
        %41 = vector.load %arg13[%c0_26, %c0_27] : memref<32x1xf32, #tpu.memory_space<vmem>>, vector<32x1xf32>
        tpu.vector_store %arg13[%c0_26, %c0_27], %40 {strides = array<i32>} : memref<32x1xf32, #tpu.memory_space<vmem>>, vector<32x1xf32>,
        %c1_28 = arith.constant 1 : index
        %c0_29 = arith.constant 0 : index
        %c0_30 = arith.constant 0 : index
        %42 = vector.load %arg6[%c1_28, %c0_29, %c0_30] : memref<2x32x1xf32, #tpu.memory_space<vmem>>, vector<1x32x1xf32>
        %43 = vector.shape_cast %42 : vector<1x32x1xf32> to vector<32x1xf32>
        %44 = arith.mulf %27, %40 : vector<32x1xf32>
        %45 = arith.subf %43, %44 : vector<32x1xf32>
        %c0_31 = arith.constant 0 : index
        %c0_32 = arith.constant 0 : index
        %46 = vector.load %arg14[%c0_31, %c0_32] : memref<32x1xf32, #tpu.memory_space<vmem>>, vector<32x1xf32>
        tpu.vector_store %arg14[%c0_31, %c0_32], %45 {strides = array<i32>} : memref<32x1xf32, #tpu.memory_space<vmem>>, vector<32x1xf32>,
      } else {
      }
      %c0 = arith.constant 0 : index
      %c0_5 = arith.constant 0 : index
      %12 = vector.load %arg10[%c0, %c0_5] : memref<32x256xf32, #tpu.memory_space<vmem>>, vector<32x256xf32>
      %c0_6 = arith.constant 0 : index
      %c0_7 = arith.constant 0 : index
      %13 = vector.load %arg13[%c0_6, %c0_7] : memref<32x1xf32, #tpu.memory_space<vmem>>, vector<32x1xf32>
      %14 = vector.broadcast %13 : vector<32x1xf32> to vector<32x256xf32>
      %15 = arith.mulf %12, %14 : vector<32x256xf32>
      %c0_8 = arith.constant 0 : index
      %c0_9 = arith.constant 0 : index
      %16 = vector.load %arg14[%c0_8, %c0_9] : memref<32x1xf32, #tpu.memory_space<vmem>>, vector<32x1xf32>
      %17 = vector.broadcast %16 : vector<32x1xf32> to vector<32x256xf32>
      %18 = arith.addf %15, %17 : vector<32x256xf32>
      %c0_10 = arith.constant 0 : index
      %c0_11 = arith.constant 0 : index
      %19 = vector.load %arg7[%c0_10, %c0_11] : memref<8x32xf32, #tpu.memory_space<vmem>>, vector<8x32xf32>
      %cst = arith.constant dense<0.000000e+00> : vector<256x8xf32>
      %20 = tpu.matmul %18, %19, %cst {dimension_numbers = #tpu.dot_dimension_numbers<[0], [1], [1], [0], [0, 1, 1, 0], [], []>} : vector<32x256xf32>, vector<8x32xf32>, vector<256x8xf32> -> vector<256x8xf32>
      %c0_12 = arith.constant 0 : index
      %c0_13 = arith.constant 0 : index
      %21 = vector.load %arg8[%c0_12, %c0_13] : memref<1x8xf32, #tpu.memory_space<vmem>>, vector<1x8xf32>
      %22 = vector.broadcast %21 : vector<1x8xf32> to vector<256x8xf32>
      %23 = arith.addf %20, %22 : vector<256x8xf32>
      %c0_14 = arith.constant 0 : index
      %c0_15 = arith.constant 0 : index
      %24 = vector.load %arg9[%c0_14, %c0_15] : memref<256x8xf32, #tpu.memory_space<vmem>>, vector<256x8xf32>
      tpu.vector_store %arg9[%c0_14, %c0_15], %23 {strides = array<i32>} : memref<256x8xf32, #tpu.memory_space<vmem>>, vector<256x8xf32>,
    } else {
    }
    return
  }
  func.func @transform_0(%arg0: i32, %arg1: i32) -> (i32, i32) {
    %c0_i32 = arith.constant 0 : i32
    %0 = arith.cmpi eq, %arg0, %c0_i32 : i32
    %c0_i32_0 = arith.constant 0 : i32
    %1 = arith.select %0, %arg1, %c0_i32_0 : i32
    %c0_i32_1 = arith.constant 0 : i32
    %c0_i32_2 = arith.constant 0 : i32
    return %1, %c0_i32_1 : i32, i32
  }
  func.func @transform_1(%arg0: i32, %arg1: i32) -> (i32, i32) {
    %c0_i32 = arith.constant 0 : i32
    %c0_i32_0 = arith.constant 0 : i32
    %c0_i32_1 = arith.constant 0 : i32
    return %c0_i32, %c0_i32_0 : i32, i32
  }
  func.func @transform_2(%arg0: i32, %arg1: i32) -> (i32, i32, i32) {
    %c0_i32 = arith.constant 0 : i32
    %c0_i32_0 = arith.constant 0 : i32
    %c0_i32_1 = arith.constant 0 : i32
    %c0_i32_2 = arith.constant 0 : i32
    return %c0_i32, %c0_i32_0, %c0_i32_1 : i32, i32, i32
  }
  func.func @transform_3(%arg0: i32, %arg1: i32) -> (i32, i32, i32) {
    %c0_i32 = arith.constant 0 : i32
    %c0_i32_0 = arith.constant 0 : i32
    %c0_i32_1 = arith.constant 0 : i32
    %c0_i32_2 = arith.constant 0 : i32
    return %c0_i32, %c0_i32_0, %c0_i32_1 : i32, i32, i32
  }
  func.func @transform_4(%arg0: i32, %arg1: i32) -> (i32, i32, i32) {
    %c0_i32 = arith.constant 0 : i32
    %c0_i32_0 = arith.constant 0 : i32
    %c0_i32_1 = arith.constant 0 : i32
    %c0_i32_2 = arith.constant 0 : i32
    return %c0_i32, %c0_i32_0, %c0_i32_1 : i32, i32, i32
  }
  func.func @transform_5(%arg0: i32, %arg1: i32) -> (i32, i32) {
    %c0_i32 = arith.constant 0 : i32
    %c0_i32_0 = arith.constant 0 : i32
    %c0_i32_1 = arith.constant 0 : i32
    return %c0_i32, %c0_i32_0 : i32, i32
  }
  func.func @transform_6(%arg0: i32, %arg1: i32) -> (i32, i32) {
    %c0_i32 = arith.constant 0 : i32
    %c0_i32_0 = arith.constant 0 : i32
    %c0_i32_1 = arith.constant 0 : i32
    return %c0_i32, %c0_i32_0 : i32, i32
  }
  func.func @transform_7(%arg0: i32, %arg1: i32) -> (i32, i32) {
    %c2_i32 = arith.constant 2 : i32
    %0 = arith.cmpi eq, %arg0, %c2_i32 : i32
    %c0_i32 = arith.constant 0 : i32
    %1 = arith.select %0, %arg1, %c0_i32 : i32
    %c0_i32_0 = arith.constant 0 : i32
    %c0_i32_1 = arith.constant 0 : i32
    return %1, %c0_i32_0 : i32, i32
  }
}

</mosaic_0001>

<llo_original>
// kernel: tpu_custom_call.1
$region0: #{tpu_custom_call.1}
  #allocation0 [shape = 'u32[]', space=smem, size = 0x4, offset = 0x4, fixed_abs, tag = 'smem constant byte address 0x4 - core index']
  #allocation1 [shape = 'u32[144,128]{1,0:T(1,128)}', space=vmem, size = 0x12000, scoped, tag = 'internal scratch']
  #allocation2 [shape = 'f32[32,256]{1,0:T(8,128)}', space=vmem, size = 0x8000, scoped, tag = 'scratch operand']
  #allocation3 [shape = 'f32[32,1]{1,0:T(8,128)}', space=vmem, size = 0x4000, scoped, tag = 'scratch operand']
  #allocation4 [shape = 'f32[32,1]{1,0:T(8,128)}', space=vmem, size = 0x4000, scoped, tag = 'scratch operand']
  #allocation5 [shape = 'f32[32,1]{1,0:T(8,128)}', space=vmem, size = 0x4000, scoped, tag = 'scratch operand']
  #allocation6 [shape = 'f32[32,1]{1,0:T(8,128)}', space=vmem, size = 0x4000, scoped, tag = 'scratch operand']
  %s0 = inlined_call_operand.vmem [shape: f32[256,16], index: 0, kind: input, shape index: {}]
  %s1 = inlined_call_operand.vmem [shape: f32[32,16], index: 1, kind: input, shape index: {}]
  %s2 = inlined_call_operand.vmem [shape: f32[1,32,32], index: 2, kind: input, shape index: {}]
  %s3 = inlined_call_operand.vmem [shape: f32[2,32,1], index: 3, kind: input, shape index: {}]
  %s4 = inlined_call_operand.vmem [shape: f32[2,32,1], index: 4, kind: input, shape index: {}]
  %s5 = inlined_call_operand.vmem [shape: f32[8,32], index: 5, kind: input, shape index: {}]
  %s6 = inlined_call_operand.vmem [shape: f32[1,8], index: 6, kind: input, shape index: {}]
  %s7 = inlined_call_operand.vmem [shape: f32[256,8], index: 7, kind: output, shape index: {}]
  %s8 = sld [smem:[#allocation0]]
  $region85: #{tpu_custom_call.1} parent=0
    _
  %s10 = ssub.s32 1, %s8
  %s11 = scalar_select 0, %s10, %s8
  loop: start=0, step=1, limit=5
  $region2: #{tpu_custom_call.1} parent=0 // loop_pre_header
    _
  $region3: #{tpu_custom_call.1} parent=0 // loop_header
    %s13 = sphi 0, %s17
    %p14 = scmp.ge.s32.totalorder %s13, 5
    %s20 = sphi 0, %s32
    %s21 = sphi 0, %s28
    %s22 = sphi 0, %s20
    %s23 = sphi 0, %s21
    %s24 = sphi 0, %s22
    %s25 = sphi 0, %s23
    %s39 = sphi 0, %s41
    %s42 = sphi 0, %s39
    %s43 = sphi 0, %s42
    %s59 = sphi 0, %s43
    %s63 = sphi 0, %s63
    %s65 = sphi 0, %s63
    %s66 = sphi 0, %s65
    %s80 = sphi 0, %s66
    %s84 = sphi 0, %s84
    %s86 = sphi 0, %s84
    %s87 = sphi 0, %s86
    %s101 = sphi 0, %s87
    %s105 = sphi 0, %s105
    %s107 = sphi 0, %s105
    %s108 = sphi 0, %s107
    %s122 = sphi 0, %s108
    %s126 = sphi 0, %s126
    %s128 = sphi 0, %s126
    %s129 = sphi 0, %s128
    %s143 = sphi 0, %s129
    %s147 = sphi 0, %s147
    %s149 = sphi 0, %s147
    %s150 = sphi 0, %s149
    %s164 = sphi 0, %s150
    %s168 = sphi 0, %s168
    %s170 = sphi 0, %s168
    %s171 = sphi 0, %s170
    %s185 = sphi 0, %s171
    %s195 = sphi 0, %s197
    %s198 = sphi 0, %s195
    %s199 = sphi 0, %s198
    %s215 = sphi 0, %s199
  $region4: #{tpu_custom_call.1} parent=0 // loop_header_branch
    %16 = sbr.rel (%p14) target = $region8
  $region5: #{tpu_custom_call.1} parent=0 // loop_body
    %s18 = ssub.s32 %s13, 1
    %s19 = ssub.s32 %s13, 2
    %s26 = sadd.s32 1, %s21
    %p27 = scmp.ge.s32.totalorder %s26, 1
    %s28 = scalar_select %p27, 0, %s26
    %s29 = sadd.s32 1, %s20
    %s30 = scalar_select %p27, %s29, %s20
    %p31 = scmp.ge.s32.totalorder %s30, 3
    %s32 = scalar_select %p31, 0, %s30
    %p33 = scmp.eq.s32.totalorder %s20, 0
    %s34 = scalar_select %p33, %s21, 0
    %p35 = scmp.eq.s32.totalorder %s32, 0
    %s36 = scalar_select %p35, %s28, 0
    %s37 = ssub.s32 %s34, %s36
    %p38 = scmp.eq.s32.totalorder %s37, 0
    %s40 = sadd.s32 %s39, 1
    %s41 = scalar_select %p38, %s39, %s40
    %p44 = pneg %p38
    %p45 = scmp.eq.s32.totalorder %s13, 2
    %p46 = por %p44, %p45
    %p47 = scmp.ne.s32.totalorder %s39, %s42
    %p48 = scmp.eq.s32.totalorder %s13, 0
    %p49 = por %p47, %p48
    %p50 = scmp.ne.s32.totalorder %s39, %s42
    %p51 = scmp.eq.s32.totalorder %s18, 2
    %p52 = por %p50, %p51
    %p53 = scmp.ne.s32.totalorder %s42, %s43
    %p54 = scmp.eq.s32.totalorder %s18, 0
    %p55 = por %p53, %p54
    %p56 = scmp.ne.s32.totalorder %s42, %s43
    %p57 = scmp.eq.s32.totalorder %s19, 2
    %p58 = por %p56, %p57
    %p60 = scmp.ne.s32.totalorder %s43, %s59
    %p61 = scmp.eq.s32.totalorder %s19, 0
    %p62 = por %p60, %p61
    %s64 = sadd.s32 %s63, 1
    %p67 = scmp.eq.s32.totalorder %s13, 2
    %p68 = scmp.ne.s32.totalorder %s63, %s65
    %p69 = scmp.eq.s32.totalorder %s13, 0
    %p70 = por %p68, %p69
    %p71 = scmp.ne.s32.totalorder %s63, %s65
    %p72 = scmp.eq.s32.totalorder %s18, 2
    %p73 = por %p71, %p72
    %p74 = scmp.ne.s32.totalorder %s65, %s66
    %p75 = scmp.eq.s32.totalorder %s18, 0
    %p76 = por %p74, %p75
    %p77 = scmp.ne.s32.totalorder %s65, %s66
    %p78 = scmp.eq.s32.totalorder %s19, 2
    %p79 = por %p77, %p78
    %p81 = scmp.ne.s32.totalorder %s66, %s80
    %p82 = scmp.eq.s32.totalorder %s19, 0
    %p83 = por %p81, %p82
    %s85 = sadd.s32 %s84, 1
    %p88 = scmp.eq.s32.totalorder %s13, 2
    %p89 = scmp.ne.s32.totalorder %s84, %s86
    %p90 = scmp.eq.s32.totalorder %s13, 0
    %p91 = por %p89, %p90
    %p92 = scmp.ne.s32.totalorder %s84, %s86
    %p93 = scmp.eq.s32.totalorder %s18, 2
    %p94 = por %p92, %p93
    %p95 = scmp.ne.s32.totalorder %s86, %s87
    %p96 = scmp.eq.s32.totalorder %s18, 0
    %p97 = por %p95, %p96
    %p98 = scmp.ne.s32.totalorder %s86, %s87
    %p99 = scmp.eq.s32.totalorder %s19, 2
    %p100 = por %p98, %p99
    %p102 = scmp.ne.s32.totalorder %s87, %s101
    %p103 = scmp.eq.s32.totalorder %s19, 0
    %p104 = por %p102, %p103
    %s106 = sadd.s32 %s105, 1
    %p109 = scmp.eq.s32.totalorder %s13, 2
    %p110 = scmp.ne.s32.totalorder %s105, %s107
    %p111 = scmp.eq.s32.totalorder %s13, 0
    %p112 = por %p110, %p111
    %p113 = scmp.ne.s32.totalorder %s105, %s107
    %p114 = scmp.eq.s32.totalorder %s18, 2
    %p115 = por %p113, %p114
    %p116 = scmp.ne.s32.totalorder %s107, %s108
    %p117 = scmp.eq.s32.totalorder %s18, 0
    %p118 = por %p116, %p117
    %p119 = scmp.ne.s32.totalorder %s107, %s108
    %p120 = scmp.eq.s32.totalorder %s19, 2
    %p121 = por %p119, %p120
    %p123 = scmp.ne.s32.totalorder %s108, %s122
    %p124 = scmp.eq.s32.totalorder %s19, 0
    %p125 = por %p123, %p124
    %s127 = sadd.s32 %s126, 1
    %p130 = scmp.eq.s32.totalorder %s13, 2
    %p131 = scmp.ne.s32.totalorder %s126, %s128
    %p132 = scmp.eq.s32.totalorder %s13, 0
    %p133 = por %p131, %p132
    %p134 = scmp.ne.s32.totalorder %s126, %s128
    %p135 = scmp.eq.s32.totalorder %s18, 2
    %p136 = por %p134, %p135
    %p137 = scmp.ne.s32.totalorder %s128, %s129
    %p138 = scmp.eq.s32.totalorder %s18, 0
    %p139 = por %p137, %p138
    %p140 = scmp.ne.s32.totalorder %s128, %s129
    %p141 = scmp.eq.s32.totalorder %s19, 2
    %p142 = por %p140, %p141
    %p144 = scmp.ne.s32.totalorder %s129, %s143
    %p145 = scmp.eq.s32.totalorder %s19, 0
    %p146 = por %p144, %p145
    %s148 = sadd.s32 %s147, 1
    %p151 = scmp.eq.s32.totalorder %s13, 2
    %p152 = scmp.ne.s32.totalorder %s147, %s149
    %p153 = scmp.eq.s32.totalorder %s13, 0
    %p154 = por %p152, %p153
    %p155 = scmp.ne.s32.totalorder %s147, %s149
    %p156 = scmp.eq.s32.totalorder %s18, 2
    %p157 = por %p155, %p156
    %p158 = scmp.ne.s32.totalorder %s149, %s150
    %p159 = scmp.eq.s32.totalorder %s18, 0
    %p160 = por %p158, %p159
    %p161 = scmp.ne.s32.totalorder %s149, %s150
    %p162 = scmp.eq.s32.totalorder %s19, 2
    %p163 = por %p161, %p162
    %p165 = scmp.ne.s32.totalorder %s150, %s164
    %p166 = scmp.eq.s32.totalorder %s19, 0
    %p167 = por %p165, %p166
    %s169 = sadd.s32 %s168, 1
    %p172 = scmp.eq.s32.totalorder %s13, 2
    %p173 = scmp.ne.s32.totalorder %s168, %s170
    %p174 = scmp.eq.s32.totalorder %s13, 0
    %p175 = por %p173, %p174
    %p176 = scmp.ne.s32.totalorder %s168, %s170
    %p177 = scmp.eq.s32.totalorder %s18, 2
    %p178 = por %p176, %p177
    %p179 = scmp.ne.s32.totalorder %s170, %s171
    %p180 = scmp.eq.s32.totalorder %s18, 0
    %p181 = por %p179, %p180
    %p182 = scmp.ne.s32.totalorder %s170, %s171
    %p183 = scmp.eq.s32.totalorder %s19, 2
    %p184 = por %p182, %p183
    %p186 = scmp.ne.s32.totalorder %s171, %s185
    %p187 = scmp.eq.s32.totalorder %s19, 0
    %p188 = por %p186, %p187
    %p189 = scmp.eq.s32.totalorder %s20, 2
    %s190 = scalar_select %p189, %s21, 0
    %p191 = scmp.eq.s32.totalorder %s32, 2
    %s192 = scalar_select %p191, %s28, 0
    %s193 = ssub.s32 %s190, %s192
    %p194 = scmp.eq.s32.totalorder %s193, 0
    %s196 = sadd.s32 %s195, 1
    %s197 = scalar_select %p194, %s195, %s196
    %p200 = pneg %p194
    %p201 = scmp.eq.s32.totalorder %s13, 2
    %p202 = por %p200, %p201
    %p203 = scmp.ne.s32.totalorder %s195, %s198
    %p204 = scmp.eq.s32.totalorder %s13, 0
    %p205 = por %p203, %p204
    %p206 = scmp.ne.s32.totalorder %s195, %s198
    %p207 = scmp.eq.s32.totalorder %s18, 2
    %p208 = por %p206, %p207
    %p209 = scmp.ne.s32.totalorder %s198, %s199
    %p210 = scmp.eq.s32.totalorder %s18, 0
    %p211 = por %p209, %p210
    %p212 = scmp.ne.s32.totalorder %s198, %s199
    %p213 = scmp.eq.s32.totalorder %s19, 2
    %p214 = por %p212, %p213
    %p216 = scmp.ne.s32.totalorder %s199, %s215
    %p217 = scmp.eq.s32.totalorder %s19, 0
    %p218 = por %p216, %p217
    %p219 = scmp.le.s32.totalorder 1, %s13
    %p220 = scmp.lt.s32.totalorder %s13, 4
    %p221 = pnand %p219, %p220
    %p222 = pneg %p221
    // Predicated region
    $region9: #{tpu_custom_call.1} parent=5 // pred_check
      _
    $region10: #{tpu_custom_call.1} parent=5 // pred_check_branch
      %224 = sbr.rel (%p221) target = $region12
    $region11: #{tpu_custom_call.1} parent=5 // pred_region
      %s225 = ssub.s32 %s13, 1
      // Predicated region
      $region13: #{tpu_custom_call.1} parent=11 // pred_check
        %p226 = pneg %p76
      $region14: #{tpu_custom_call.1} parent=11 // pred_check_branch
        %228 = sbr.rel (%p226) target = $region16
      $region15: #{tpu_custom_call.1} parent=11 // pred_region
        _
      $region16: #{tpu_custom_call.1} parent=11 // pred_fallthru
        _
      // Predicated region
      $region17: #{tpu_custom_call.1} parent=11 // pred_check
        %p229 = pneg %p97
      $region18: #{tpu_custom_call.1} parent=11 // pred_check_branch
        %231 = sbr.rel (%p229) target = $region20
      $region19: #{tpu_custom_call.1} parent=11 // pred_region
        _
      $region20: #{tpu_custom_call.1} parent=11 // pred_fallthru
        _
      // Predicated region
      $region21: #{tpu_custom_call.1} parent=11 // pred_check
        %p232 = pneg %p118
      $region22: #{tpu_custom_call.1} parent=11 // pred_check_branch
        %234 = sbr.rel (%p232) target = $region24
      $region23: #{tpu_custom_call.1} parent=11 // pred_region
        _
      $region24: #{tpu_custom_call.1} parent=11 // pred_fallthru
        _
      // Predicated region
      $region25: #{tpu_custom_call.1} parent=11 // pred_check
        %p235 = pneg %p139
      $region26: #{tpu_custom_call.1} parent=11 // pred_check_branch
        %237 = sbr.rel (%p235) target = $region28
      $region27: #{tpu_custom_call.1} parent=11 // pred_region
        _
      $region28: #{tpu_custom_call.1} parent=11 // pred_fallthru
        _
      // Predicated region
      $region29: #{tpu_custom_call.1} parent=11 // pred_check
        %p238 = pneg %p160
      $region30: #{tpu_custom_call.1} parent=11 // pred_check_branch
        %240 = sbr.rel (%p238) target = $region32
      $region31: #{tpu_custom_call.1} parent=11 // pred_region
        _
      $region32: #{tpu_custom_call.1} parent=11 // pred_fallthru
        _
      // Predicated region
      $region33: #{tpu_custom_call.1} parent=11 // pred_check
        %p241 = pneg %p181
      $region34: #{tpu_custom_call.1} parent=11 // pred_check_branch
        %243 = sbr.rel (%p241) target = $region36
      $region35: #{tpu_custom_call.1} parent=11 // pred_region
        _
      $region36: #{tpu_custom_call.1} parent=11 // pred_fallthru
        _
    $region12: #{tpu_custom_call.1} parent=5 // pred_fallthru
      _
    %p244 = scmp.lt.s32.totalorder %s13, 3
    // Predicated region
    $region37: #{tpu_custom_call.1} parent=5 // pred_check
      %p245 = pneg %p244
    $region38: #{tpu_custom_call.1} parent=5 // pred_check_branch
      %247 = sbr.rel (%p245) target = $region40
    $region39: #{tpu_custom_call.1} parent=5 // pred_region
      // Predicated region
      $region41: #{tpu_custom_call.1} parent=39 // pred_check
        %p248 = pneg %p49
      $region42: #{tpu_custom_call.1} parent=39 // pred_check_branch
        %250 = sbr.rel (%p248) target = $region44
      $region43: #{tpu_custom_call.1} parent=39 // pred_region
        %p251 = scmp.eq.s32.totalorder %s20, 0
        %s252 = scalar_select %p251, %s21, 0
        %s253 = smul.u32 32, %s252
        %p254 = scmp.lt.s32.totalorder %s253, 31
        %s255 = scalar_select %p254, %s253, 31
        %s256 = smul.addr %s255, 8
        %s257 = scalar_lea.vmem %s0, %s256
        %p258 = scmp.eq.s32.totalorder %s20, 0
        %s259 = scalar_select %p258, %s21, 0
        %s260 = smul.u32 32, %s259
      $region44: #{tpu_custom_call.1} parent=39 // pred_fallthru
        _
    $region40: #{tpu_custom_call.1} parent=5 // pred_fallthru
      _
    %p261 = scmp.le.s32.totalorder 1, %s13
    %p262 = scmp.lt.s32.totalorder %s13, 4
    %p263 = pnand %p261, %p262
    %p264 = pneg %p263
    // Predicated region
    $region45: #{tpu_custom_call.1} parent=5 // pred_check
      _
    $region46: #{tpu_custom_call.1} parent=5 // pred_check_branch
      %266 = sbr.rel (%p263) target = $region48
    $region47: #{tpu_custom_call.1} parent=5 // pred_region
      %s267 = ssub.s32 %s13, 1
      %p268 = scmp.eq.s32.totalorder %s22, 0
      %s269 = scalar_select %p268, %s23, 0
      %s270 = smul.u32 32, %s269
      %p271 = scmp.lt.s32.totalorder %s270, 31
      %s272 = scalar_select %p271, %s270, 31
      %s273 = smul.addr %s272, 8
      %s274 = scalar_lea.vmem %s0, %s273
      %p275 = pneg %p55
      %p276 = pneg %p52
      %p277 = pneg %p76
      %p278 = pneg %p73
      %p279 = pneg %p97
      %p280 = pneg %p94
      %p281 = pneg %p118
      %p282 = pneg %p115
      %p283 = pneg %p139
      %p284 = pneg %p136
      %p285 = pneg %p160
      %p286 = pneg %p157
      %p287 = pneg %p181
      %p288 = pneg %p178
      %p289 = pneg %p211
      %p290 = pneg %p208
      %p291 = scmp.eq.s32.totalorder %s22, 2
      %s292 = scalar_select %p291, %s23, 0
      %s293 = smul.u32 32, %s292
      %p294 = scmp.lt.s32.totalorder %s293, 31
      %s295 = scalar_select %p294, %s293, 31
      %s296 = smul.addr %s295, 8
      %s297 = scalar_lea.vmem %s7, %s296
      %p298 = scmp.eq.s32.totalorder %s22, 0
      %s299 = scalar_select %p298, %s23, 0
      %s300 = smul.u32 32, %s299
      %p301 = scmp.lt.s32.totalorder %s300, 31
      %s302 = scalar_select %p301, %s300, 31
      %s303 = smul.addr %s302, 8
      %s304 = scalar_lea.vmem %s0, %s303
      %p305 = scmp.eq.s32.totalorder %s22, 0
      %s306 = scalar_select %p305, %s23, 0
      %s307 = smul.u32 32, %s306
      %p308 = scmp.eq.s32.totalorder %s22, 2
      %s309 = scalar_select %p308, %s23, 0
      %s310 = smul.u32 32, %s309
      %p311 = scmp.lt.s32.totalorder %s310, 31
      %s312 = scalar_select %p311, %s310, 31
      %s313 = smul.addr %s312, 8
      %s314 = scalar_lea.vmem %s7, %s313
      %p315 = scmp.eq.s32.totalorder %s22, 2
      %s316 = scalar_select %p315, %s23, 0
      %s317 = smul.u32 32, %s316
      %p318 = scmp.eq.s32.totalorder %s22, 0
      // Predicated region
      $region49: #{tpu_custom_call.1} parent=47 // pred_check
        %p319 = pneg %p318
      $region50: #{tpu_custom_call.1} parent=47 // pred_check_branch
        %321 = sbr.rel (%p319) target = $region52
      $region51: #{tpu_custom_call.1} parent=47 // pred_region
        %v322 = vld [vmem:[%s304] sm:$0xff]
        %v323 = vld [vmem:[%s304 + $0x8] sm:$0xff]
        %v324 = vld [vmem:[%s304 + $0x10] sm:$0xff]
        %v325 = vld [vmem:[%s304 + $0x18] sm:$0xff]
        %v326 = vld [vmem:[%s304 + $0x20] sm:$0xff]
        %v327 = vld [vmem:[%s304 + $0x28] sm:$0xff]
        %v328 = vld [vmem:[%s304 + $0x30] sm:$0xff]
        %v329 = vld [vmem:[%s304 + $0x38] sm:$0xff]
        %v330 = vld [vmem:[%s304 + $0x40] sm:$0xff]
        %v331 = vld [vmem:[%s304 + $0x48] sm:$0xff]
        %v332 = vld [vmem:[%s304 + $0x50] sm:$0xff]
        %v333 = vld [vmem:[%s304 + $0x58] sm:$0xff]
        %v334 = vld [vmem:[%s304 + $0x60] sm:$0xff]
        %v335 = vld [vmem:[%s304 + $0x68] sm:$0xff]
        %v336 = vld [vmem:[%s304 + $0x70] sm:$0xff]
        %v337 = vld [vmem:[%s304 + $0x78] sm:$0xff]
        %v338 = vld [vmem:[%s304 + $0x80] sm:$0xff]
        %v339 = vld [vmem:[%s304 + $0x88] sm:$0xff]
        %v340 = vld [vmem:[%s304 + $0x90] sm:$0xff]
        %v341 = vld [vmem:[%s304 + $0x98] sm:$0xff]
        %v342 = vld [vmem:[%s304 + $0xa0] sm:$0xff]
        %v343 = vld [vmem:[%s304 + $0xa8] sm:$0xff]
        %v344 = vld [vmem:[%s304 + $0xb0] sm:$0xff]
        %v345 = vld [vmem:[%s304 + $0xb8] sm:$0xff]
        %v346 = vld [vmem:[%s304 + $0xc0] sm:$0xff]
        %v347 = vld [vmem:[%s304 + $0xc8] sm:$0xff]
        %v348 = vld [vmem:[%s304 + $0xd0] sm:$0xff]
        %v349 = vld [vmem:[%s304 + $0xd8] sm:$0xff]
        %v350 = vld [vmem:[%s304 + $0xe0] sm:$0xff]
        %v351 = vld [vmem:[%s304 + $0xe8] sm:$0xff]
        %v352 = vld [vmem:[%s304 + $0xf0] sm:$0xff]
        %v353 = vld [vmem:[%s304 + $0xf8] sm:$0xff]
        %v354 = vld [vmem:[%s1] sm:$0xff]
        %v355 = vld [vmem:[%s1 + $0x8] sm:$0xff]
        %v356 = vld [vmem:[%s1 + $0x10] sm:$0xff]
        %v357 = vld [vmem:[%s1 + $0x18] sm:$0xff]
        %vm358 = vcmask 130048
        %v360 = vsel %vm358, %v354, 0
        %v363 = vsel %vm358, %v355, 0
        %v366 = vsel %vm358, %v356, 0
        %v369 = vsel %vm358, %v357, 0
        %v372 = vsel %vm358, %v322, 0
        %v375 = vsel %vm358, %v323, 0
        %v378 = vsel %vm358, %v324, 0
        %v381 = vsel %vm358, %v325, 0
        %v384 = vsel %vm358, %v326, 0
        %v387 = vsel %vm358, %v327, 0
        %v390 = vsel %vm358, %v328, 0
        %v393 = vsel %vm358, %v329, 0
        %v396 = vsel %vm358, %v330, 0
        %v399 = vsel %vm358, %v331, 0
        %v402 = vsel %vm358, %v332, 0
        %v405 = vsel %vm358, %v333, 0
        %v408 = vsel %vm358, %v334, 0
        %v411 = vsel %vm358, %v335, 0
        %v414 = vsel %vm358, %v336, 0
        %v417 = vsel %vm358, %v337, 0
        %v420 = vsel %vm358, %v338, 0
        %v423 = vsel %vm358, %v339, 0
        %v426 = vsel %vm358, %v340, 0
        %v429 = vsel %vm358, %v341, 0
        %v432 = vsel %vm358, %v342, 0
        %v435 = vsel %vm358, %v343, 0
        %v438 = vsel %vm358, %v344, 0
        %v441 = vsel %vm358, %v345, 0
        %v444 = vsel %vm358, %v346, 0
        %v447 = vsel %vm358, %v347, 0
        %v450 = vsel %vm358, %v348, 0
        %v453 = vsel %vm358, %v349, 0
        %v456 = vsel %vm358, %v350, 0
        %v459 = vsel %vm358, %v351, 0
        %v462 = vsel %vm358, %v352, 0
        %v465 = vsel %vm358, %v353, 0
        %467 = vmatprep.subr.mxu0 0.0
        %468 = vmatpush1.xpose.msra.mxu0 %v372
        %469 = vmatprep.subr.mxu0 0.0
        %470 = vmatpush1.xpose.msra.mxu0 %v375
        %471 = vmatprep.subr.mxu0 0.0
        %472 = vmatpush1.xpose.msra.mxu0 %v378
        %473 = vmatprep.subr.mxu0 0.0
        %474 = vmatpush1.xpose.msra.mxu0 %v381
        %475 = vmatprep.subr.mxu0 0.0
        %476 = vmatpush1.xpose.msra.mxu0 %v384
        %477 = vmatprep.subr.mxu0 0.0
        %478 = vmatpush1.xpose.msra.mxu0 %v387
        %479 = vmatprep.subr.mxu0 0.0
        %480 = vmatpush1.xpose.msra.mxu0 %v390
        %481 = vmatprep.subr.mxu0 0.0
        %482 = vmatpush1.xpose.msra.mxu0 %v393
        %483 = vmatprep.subr.mxu0 0.0
        %484 = vmatpush1.xpose.msra.mxu0 %v396
        %485 = vmatprep.subr.mxu0 0.0
        %486 = vmatpush1.xpose.msra.mxu0 %v399
        %487 = vmatprep.subr.mxu0 0.0
        %488 = vmatpush1.xpose.msra.mxu0 %v402
        %489 = vmatprep.subr.mxu0 0.0
        %490 = vmatpush1.xpose.msra.mxu0 %v405
        %491 = vmatprep.subr.mxu0 0.0
        %492 = vmatpush1.xpose.msra.mxu0 %v408
        %493 = vmatprep.subr.mxu0 0.0
        %494 = vmatpush1.xpose.msra.mxu0 %v411
        %495 = vmatprep.subr.mxu0 0.0
        %496 = vmatpush1.xpose.msra.mxu0 %v414
        %497 = vmatprep.subr.mxu0 0.0
        %498 = vmatpush1.xpose.msra.mxu0 %v417
        %499 = vmatprep.subr.mxu0 0.0
        %500 = vmatpush1.xpose.msra.mxu0 %v420
        %501 = vmatprep.subr.mxu0 0.0
        %502 = vmatpush1.xpose.msra.mxu0 %v423
        %503 = vmatprep.subr.mxu0 0.0
        %504 = vmatpush1.xpose.msra.mxu0 %v426
        %505 = vmatprep.subr.mxu0 0.0
        %506 = vmatpush1.xpose.msra.mxu0 %v429
        %507 = vmatprep.subr.mxu0 0.0
        %508 = vmatpush1.xpose.msra.mxu0 %v432
        %509 = vmatprep.subr.mxu0 0.0
        %510 = vmatpush1.xpose.msra.mxu0 %v435
        %511 = vmatprep.subr.mxu0 0.0
        %512 = vmatpush1.xpose.msra.mxu0 %v438
        %513 = vmatprep.subr.mxu0 0.0
        %514 = vmatpush1.xpose.msra.mxu0 %v441
        %515 = vmatprep.subr.mxu0 0.0
        %516 = vmatpush1.xpose.msra.mxu0 %v444
        %517 = vmatprep.subr.mxu0 0.0
        %518 = vmatpush1.xpose.msra.mxu0 %v447
        %519 = vmatprep.subr.mxu0 0.0
        %520 = vmatpush1.xpose.msra.mxu0 %v450
        %521 = vmatprep.subr.mxu0 0.0
        %522 = vmatpush1.xpose.msra.mxu0 %v453
        %523 = vmatprep.subr.mxu0 0.0
        %524 = vmatpush1.xpose.msra.mxu0 %v456
        %525 = vmatprep.subr.mxu0 0.0
        %526 = vmatpush1.xpose.msra.mxu0 %v459
        %527 = vmatprep.subr.mxu0 0.0
        %528 = vmatpush1.xpose.msra.mxu0 %v462
        %529 = vmatprep.subr.mxu0 0.0
        %530 = vmatpush1.xpose.msra.mxu0 %v465
        %531 = vmatprep.mubr.f32.mxu0 0.0
        %532 = vmatmul.mubr.f32.gmra.mrb[0].mxu0 %v360
        %v533 = vpop.f32.mrb[0].mxu0
        %v534 = vadd.f32 0.0, %v533
        %v535 = vpop.f32.mrb[0].mxu0
        %v536 = vadd.f32 0.0, %v535
        %537 = vmatprep.mubr.f32.mxu0 0.0
        %538 = vmatmul.mubr.f32.gmra.mrb[0].mxu0 %v363
        %v539 = vpop.f32.mrb[0].mxu0
        %v540 = vadd.f32 0.0, %v539
        %v541 = vpop.f32.mrb[0].mxu0
        %v542 = vadd.f32 0.0, %v541
        %543 = vmatprep.mubr.f32.mxu0 0.0
        %544 = vmatmul.mubr.f32.gmra.mrb[0].mxu0 %v366
        %v545 = vpop.f32.mrb[0].mxu0
        %v546 = vadd.f32 0.0, %v545
        %v547 = vpop.f32.mrb[0].mxu0
        %v548 = vadd.f32 0.0, %v547
        %549 = vmatprep.mubr.f32.mxu0 0.0
        %550 = vmatmul.mubr.f32.gmra.mrb[0].mxu0 %v369
        %v551 = vpop.f32.mrb[0].mxu0
        %v552 = vadd.f32 0.0, %v551
        %v553 = vpop.f32.mrb[0].mxu0
        %v554 = vadd.f32 0.0, %v553
        %555 = vdwg.mxu0
        %v556 = vmax.f32 %v534, 0.0
        %v557 = vmax.f32 %v536, 0.0
        %v558 = vmax.f32 %v540, 0.0
        %v559 = vmax.f32 %v542, 0.0
        %v560 = vmax.f32 %v546, 0.0
        %v561 = vmax.f32 %v548, 0.0
        %v562 = vmax.f32 %v552, 0.0
        %v563 = vmax.f32 %v554, 0.0
        %564 = vst [vmem:[#allocation2] sm:$0xff] %v556
        %565 = vst [vmem:[#allocation2 + $0x8] sm:$0xff] %v557
        %566 = vst [vmem:[#allocation2 + $0x10] sm:$0xff] %v558
        %567 = vst [vmem:[#allocation2 + $0x18] sm:$0xff] %v559
        %568 = vst [vmem:[#allocation2 + $0x20] sm:$0xff] %v560
        %569 = vst [vmem:[#allocation2 + $0x28] sm:$0xff] %v561
        %570 = vst [vmem:[#allocation2 + $0x30] sm:$0xff] %v562
        %571 = vst [vmem:[#allocation2 + $0x38] sm:$0xff] %v563
        %p572 = scmp.eq.s32.totalorder %s23, 0
        // Predicated region
        $region53: #{tpu_custom_call.1} parent=51 // pred_check
          %p573 = pneg %p572
        $region54: #{tpu_custom_call.1} parent=51 // pred_check_branch
          %575 = sbr.rel (%p573) target = $region56
        $region55: #{tpu_custom_call.1} parent=51 // pred_region
          %vm576 = vcmask 7168
          %577 = vst.msk [vmem:[#allocation3] sm:$0xff] %vm576, 0.0
          %578 = vst.msk [vmem:[#allocation3 + $0x8] sm:$0xff] %vm576, 0.0
          %579 = vst.msk [vmem:[#allocation3 + $0x10] sm:$0xff] %vm576, 0.0
          %580 = vst.msk [vmem:[#allocation3 + $0x18] sm:$0xff] %vm576, 0.0
          %581 = vst.msk [vmem:[#allocation4] sm:$0xff] %vm576, 0.0
          %582 = vst.msk [vmem:[#allocation4 + $0x8] sm:$0xff] %vm576, 0.0
          %583 = vst.msk [vmem:[#allocation4 + $0x10] sm:$0xff] %vm576, 0.0
          %584 = vst.msk [vmem:[#allocation4 + $0x18] sm:$0xff] %vm576, 0.0
        $region56: #{tpu_custom_call.1} parent=51 // pred_fallthru
          _
        %v585 = vld [vmem:[#allocation3] sm:$0xff]
        %v586 = vld [vmem:[#allocation3 + $0x8] sm:$0xff]
        %v587 = vld [vmem:[#allocation3 + $0x10] sm:$0xff]
        %v588 = vld [vmem:[#allocation3 + $0x18] sm:$0xff]
        %v589 = vadd.f32 %v556, %v557
        %590 = vadd.xlane.f32.xlu0 %v589
        %v591 = vpop.xlane.xlu0 %590
        %v592 = vadd.f32 %v558, %v559
        %593 = vadd.xlane.f32.xlu0 %v592
        %v594 = vpop.xlane.xlu0 %593
        %v595 = vadd.f32 %v560, %v561
        %596 = vadd.xlane.f32.xlu0 %v595
        %v597 = vpop.xlane.xlu0 %596
        %v598 = vadd.f32 %v562, %v563
        %599 = vadd.xlane.f32.xlu0 %v598
        %v600 = vpop.xlane.xlu0 %599
        %v601 = vadd.f32 %v585, %v591
        %v602 = vadd.f32 %v586, %v594
        %v603 = vadd.f32 %v587, %v597
        %v604 = vadd.f32 %v588, %v600
        %vm605 = vcmask 7168
        %606 = vst.msk [vmem:[#allocation3] sm:$0xff] %vm605, %v601
        %607 = vst.msk [vmem:[#allocation3 + $0x8] sm:$0xff] %vm605, %v602
        %608 = vst.msk [vmem:[#allocation3 + $0x10] sm:$0xff] %vm605, %v603
        %609 = vst.msk [vmem:[#allocation3 + $0x18] sm:$0xff] %vm605, %v604
        %v610 = vld [vmem:[#allocation4] sm:$0xff]
        %v611 = vld [vmem:[#allocation4 + $0x8] sm:$0xff]
        %v612 = vld [vmem:[#allocation4 + $0x10] sm:$0xff]
        %v613 = vld [vmem:[#allocation4 + $0x18] sm:$0xff]
        %v614 = vmul.f32 %v556, %v556
        %v615 = vmul.f32 %v557, %v557
        %v616 = vmul.f32 %v558, %v558
        %v617 = vmul.f32 %v559, %v559
        %v618 = vmul.f32 %v560, %v560
        %v619 = vmul.f32 %v561, %v561
        %v620 = vmul.f32 %v562, %v562
        %v621 = vmul.f32 %v563, %v563
        %v622 = vadd.f32 %v614, %v615
        %623 = vadd.xlane.f32.xlu0 %v622
        %v624 = vpop.xlane.xlu0 %623
        %v625 = vadd.f32 %v616, %v617
        %626 = vadd.xlane.f32.xlu0 %v625
        %v627 = vpop.xlane.xlu0 %626
        %v628 = vadd.f32 %v618, %v619
        %629 = vadd.xlane.f32.xlu0 %v628
        %v630 = vpop.xlane.xlu0 %629
        %v631 = vadd.f32 %v620, %v621
        %632 = vadd.xlane.f32.xlu0 %v631
        %v633 = vpop.xlane.xlu0 %632
        %v634 = vadd.f32 %v610, %v624
        %v635 = vadd.f32 %v611, %v627
        %v636 = vadd.f32 %v612, %v630
        %v637 = vadd.f32 %v613, %v633
        %638 = vst.msk [vmem:[#allocation4] sm:$0xff] %vm605, %v634
        %639 = vst.msk [vmem:[#allocation4 + $0x8] sm:$0xff] %vm605, %v635
        %640 = vst.msk [vmem:[#allocation4 + $0x10] sm:$0xff] %vm605, %v636
        %641 = vst.msk [vmem:[#allocation4 + $0x18] sm:$0xff] %vm605, %v637
      $region52: #{tpu_custom_call.1} parent=47 // pred_fallthru
        _
      %p642 = scmp.eq.s32.totalorder %s22, 1
      // Predicated region
      $region57: #{tpu_custom_call.1} parent=47 // pred_check
        %p643 = pneg %p642
      $region58: #{tpu_custom_call.1} parent=47 // pred_check_branch
        %645 = sbr.rel (%p643) target = $region60
      $region59: #{tpu_custom_call.1} parent=47 // pred_region
        %p646 = scmp.eq.s32.totalorder %s23, 0
        // Predicated region
        $region61: #{tpu_custom_call.1} parent=59 // pred_check
          %p647 = pneg %p646
        $region62: #{tpu_custom_call.1} parent=59 // pred_check_branch
          %649 = sbr.rel (%p647) target = $region64
        $region63: #{tpu_custom_call.1} parent=59 // pred_region
          %v650 = vld [vmem:[#allocation3] sm:$0xff]
          %v651 = vld [vmem:[#allocation3 + $0x8] sm:$0xff]
          %v652 = vld [vmem:[#allocation3 + $0x10] sm:$0xff]
          %v653 = vld [vmem:[#allocation3 + $0x18] sm:$0xff]
          %v654 = vmul.f32 %v650, 0.00390625
          %v655 = vmul.f32 %v651, 0.00390625
          %v656 = vmul.f32 %v652, 0.00390625
          %v657 = vmul.f32 %v653, 0.00390625
          %v658 = vld [vmem:[#allocation4] sm:$0xff]
          %v659 = vld [vmem:[#allocation4 + $0x8] sm:$0xff]
          %v660 = vld [vmem:[#allocation4 + $0x10] sm:$0xff]
          %v661 = vld [vmem:[#allocation4 + $0x18] sm:$0xff]
          %v662 = vmul.f32 %v658, 0.00390625
          %v663 = vmul.f32 %v659, 0.00390625
          %v664 = vmul.f32 %v660, 0.00390625
          %v665 = vmul.f32 %v661, 0.00390625
          %v666 = vmul.f32 %v654, %v654
          %v667 = vmul.f32 %v655, %v655
          %v668 = vmul.f32 %v656, %v656
          %v669 = vmul.f32 %v657, %v657
          %v670 = vsub.f32 %v662, %v666
          %v671 = vsub.f32 %v663, %v667
          %v672 = vsub.f32 %v664, %v668
          %v673 = vsub.f32 %v665, %v669
          %v674 = vmax.f32 %v670, 0.0
          %v675 = vmax.f32 %v671, 0.0
          %v676 = vmax.f32 %v672, 0.0
          %v677 = vmax.f32 %v673, 0.0
          %v678 = vadd.f32 %v674, 1e-05
          %v679 = vadd.f32 %v675, 1e-05
          %v680 = vadd.f32 %v676, 1e-05
          %v681 = vadd.f32 %v677, 1e-05
          %v682 = vrsqrt.pop %v678
          %v683 = vrsqrt.pop %v679
          %v684 = vrsqrt.pop %v680
          %v685 = vrsqrt.pop %v681
          %v686 = vld [vmem:[%s3] sm:$0xff]
          %v687 = vld [vmem:[%s3 + $0x8] sm:$0xff]
          %v688 = vld [vmem:[%s3 + $0x10] sm:$0xff]
          %v689 = vld [vmem:[%s3 + $0x18] sm:$0xff]
          %v690 = vmul.f32 %v686, %v682
          %v691 = vmul.f32 %v687, %v683
          %v692 = vmul.f32 %v688, %v684
          %v693 = vmul.f32 %v689, %v685
          %vm694 = vcmask 7168
          %695 = vst.msk [vmem:[#allocation5] sm:$0xff] %vm694, %v690
          %696 = vst.msk [vmem:[#allocation5 + $0x8] sm:$0xff] %vm694, %v691
          %697 = vst.msk [vmem:[#allocation5 + $0x10] sm:$0xff] %vm694, %v692
          %698 = vst.msk [vmem:[#allocation5 + $0x18] sm:$0xff] %vm694, %v693
          %v699 = vld [vmem:[%s4] sm:$0xff]
          %v700 = vld [vmem:[%s4 + $0x8] sm:$0xff]
          %v701 = vld [vmem:[%s4 + $0x10] sm:$0xff]
          %v702 = vld [vmem:[%s4 + $0x18] sm:$0xff]
          %v703 = vmul.f32 %v654, %v690
          %v704 = vmul.f32 %v655, %v691
          %v705 = vmul.f32 %v656, %v692
          %v706 = vmul.f32 %v657, %v693
          %v707 = vsub.f32 %v699, %v703
          %v708 = vsub.f32 %v700, %v704
          %v709 = vsub.f32 %v701, %v705
          %v710 = vsub.f32 %v702, %v706
          %711 = vst.msk [vmem:[#allocation6] sm:$0xff] %vm694, %v707
          %712 = vst.msk [vmem:[#allocation6 + $0x8] sm:$0xff] %vm694, %v708
          %713 = vst.msk [vmem:[#allocation6 + $0x10] sm:$0xff] %vm694, %v709
          %714 = vst.msk [vmem:[#allocation6 + $0x18] sm:$0xff] %vm694, %v710
          %715 = vst.msk [vmem:[#allocation3] sm:$0xff] %vm694, 0.0
          %716 = vst.msk [vmem:[#allocation3 + $0x8] sm:$0xff] %vm694, 0.0
          %717 = vst.msk [vmem:[#allocation3 + $0x10] sm:$0xff] %vm694, 0.0
          %718 = vst.msk [vmem:[#allocation3 + $0x18] sm:$0xff] %vm694, 0.0
          %719 = vst.msk [vmem:[#allocation4] sm:$0xff] %vm694, 0.0
          %720 = vst.msk [vmem:[#allocation4 + $0x8] sm:$0xff] %vm694, 0.0
          %721 = vst.msk [vmem:[#allocation4 + $0x10] sm:$0xff] %vm694, 0.0
          %722 = vst.msk [vmem:[#allocation4 + $0x18] sm:$0xff] %vm694, 0.0
        $region64: #{tpu_custom_call.1} parent=59 // pred_fallthru
          _
        %v723 = vld [vmem:[#allocation2] sm:$0xff]
        %v724 = vld [vmem:[#allocation2 + $0x8] sm:$0xff]
        %v725 = vld [vmem:[#allocation2 + $0x10] sm:$0xff]
        %v726 = vld [vmem:[#allocation2 + $0x18] sm:$0xff]
        %v727 = vld [vmem:[#allocation2 + $0x20] sm:$0xff]
        %v728 = vld [vmem:[#allocation2 + $0x28] sm:$0xff]
        %v729 = vld [vmem:[#allocation2 + $0x30] sm:$0xff]
        %v730 = vld [vmem:[#allocation2 + $0x38] sm:$0xff]
        %v731 = vld [vmem:[#allocation5] sm:$0xff]
        %v732 = vld [vmem:[#allocation5 + $0x8] sm:$0xff]
        %v733 = vld [vmem:[#allocation5 + $0x10] sm:$0xff]
        %v734 = vld [vmem:[#allocation5 + $0x18] sm:$0xff]
        %736 = vset.pattern.permute.xlu0 0
        %737 = vperm.xlu0 %736, %v731
        %v738 = vpop.permute.xlu0 %737
        %741 = vset.pattern.permute.xlu0 0
        %742 = vperm.xlu0 %741, %v732
        %v743 = vpop.permute.xlu0 %742
        %746 = vset.pattern.permute.xlu0 0
        %747 = vperm.xlu0 %746, %v733
        %v748 = vpop.permute.xlu0 %747
        %751 = vset.pattern.permute.xlu0 0
        %752 = vperm.xlu0 %751, %v734
        %v753 = vpop.permute.xlu0 %752
        %v755 = vmul.f32 %v723, %v738
        %v756 = vmul.f32 %v724, %v738
        %v757 = vmul.f32 %v725, %v743
        %v758 = vmul.f32 %v726, %v743
        %v759 = vmul.f32 %v727, %v748
        %v760 = vmul.f32 %v728, %v748
        %v761 = vmul.f32 %v729, %v753
        %v762 = vmul.f32 %v730, %v753
        %v763 = vld [vmem:[#allocation6] sm:$0xff]
        %v764 = vld [vmem:[#allocation6 + $0x8] sm:$0xff]
        %v765 = vld [vmem:[#allocation6 + $0x10] sm:$0xff]
        %v766 = vld [vmem:[#allocation6 + $0x18] sm:$0xff]
        %768 = vset.pattern.permute.xlu0 0
        %769 = vperm.xlu0 %768, %v763
        %v770 = vpop.permute.xlu0 %769
        %773 = vset.pattern.permute.xlu0 0
        %774 = vperm.xlu0 %773, %v764
        %v775 = vpop.permute.xlu0 %774
        %778 = vset.pattern.permute.xlu0 0
        %779 = vperm.xlu0 %778, %v765
        %v780 = vpop.permute.xlu0 %779
        %783 = vset.pattern.permute.xlu0 0
        %784 = vperm.xlu0 %783, %v766
        %v785 = vpop.permute.xlu0 %784
        %v787 = vadd.f32 %v755, %v770
        %v788 = vadd.f32 %v756, %v770
        %v789 = vadd.f32 %v757, %v775
        %v790 = vadd.f32 %v758, %v775
        %v791 = vadd.f32 %v759, %v780
        %v792 = vadd.f32 %v760, %v780
        %v793 = vadd.f32 %v761, %v785
        %v794 = vadd.f32 %v762, %v785
        %v795 = vld [vmem:[%s2] sm:$0xff]
        %v796 = vld [vmem:[%s2 + $0x8] sm:$0xff]
        %v797 = vld [vmem:[%s2 + $0x10] sm:$0xff]
        %v798 = vld [vmem:[%s2 + $0x18] sm:$0xff]
        %vm799 = vcmask 261120
        %v801 = vsel %vm799, %v795, 0
        %v804 = vsel %vm799, %v796, 0
        %v807 = vsel %vm799, %v797, 0
        %v810 = vsel %vm799, %v798, 0
        %812 = vmatprep.subr.mxu0 %v788
        %813 = vmatpush1.msra.mxu0 %v787
        %814 = vmatprep.subr.mxu0 %v790
        %815 = vmatpush1.msra.mxu0 %v789
        %816 = vmatprep.subr.mxu0 %v792
        %817 = vmatpush1.msra.mxu0 %v791
        %818 = vmatprep.subr.mxu0 %v794
        %819 = vmatpush1.msra.mxu0 %v793
        %820 = vmatprep.subr.mxu0 0.0
        %821 = vmatpush1.msra.mxu0 0.0
        %822 = vmatprep.subr.mxu0 0.0
        %823 = vmatpush1.msra.mxu0 0.0
        %824 = vmatprep.subr.mxu0 0.0
        %825 = vmatpush1.msra.mxu0 0.0
        %826 = vmatprep.subr.mxu0 0.0
        %827 = vmatpush1.msra.mxu0 0.0
        %828 = vmatprep.subr.mxu0 0.0
        %829 = vmatpush1.msra.mxu0 0.0
        %830 = vmatprep.subr.mxu0 0.0
        %831 = vmatpush1.msra.mxu0 0.0
        %832 = vmatprep.subr.mxu0 0.0
        %833 = vmatpush1.msra.mxu0 0.0
        %834 = vmatprep.subr.mxu0 0.0
        %835 = vmatpush1.msra.mxu0 0.0
        %836 = vmatprep.subr.mxu0 0.0
        %837 = vmatpush1.msra.mxu0 0.0
        %838 = vmatprep.subr.mxu0 0.0
        %839 = vmatpush1.msra.mxu0 0.0
        %840 = vmatprep.subr.mxu0 0.0
        %841 = vmatpush1.msra.mxu0 0.0
        %842 = vmatprep.subr.mxu0 0.0
        %843 = vmatpush1.msra.mxu0 0.0
        %844 = vmatprep.subr.mxu0 0.0
        %845 = vmatpush1.msra.mxu0 0.0
        %846 = vmatprep.subr.mxu0 0.0
        %847 = vmatpush1.msra.mxu0 0.0
        %848 = vmatprep.subr.mxu0 0.0
        %849 = vmatpush1.msra.mxu0 0.0
        %850 = vmatprep.subr.mxu0 0.0
        %851 = vmatpush1.msra.mxu0 0.0
        %852 = vmatprep.subr.mxu0 0.0
        %853 = vmatpush1.msra.mxu0 0.0
        %854 = vmatprep.subr.mxu0 0.0
        %855 = vmatpush1.msra.mxu0 0.0
        %856 = vmatprep.subr.mxu0 0.0
        %857 = vmatpush1.msra.mxu0 0.0
        %858 = vmatprep.subr.mxu0 0.0
        %859 = vmatpush1.msra.mxu0 0.0
        %860 = vmatprep.subr.mxu0 0.0
        %861 = vmatpush1.msra.mxu0 0.0
        %862 = vmatprep.subr.mxu0 0.0
        %863 = vmatpush1.msra.mxu0 0.0
        %864 = vmatprep.subr.mxu0 0.0
        %865 = vmatpush1.msra.mxu0 0.0
        %866 = vmatprep.subr.mxu0 0.0
        %867 = vmatpush1.msra.mxu0 0.0
        %868 = vmatprep.subr.mxu0 0.0
        %869 = vmatpush1.msra.mxu0 0.0
        %870 = vmatprep.subr.mxu0 0.0
        %871 = vmatpush1.msra.mxu0 0.0
        %872 = vmatprep.subr.mxu0 0.0
        %873 = vmatpush1.msra.mxu0 0.0
        %874 = vmatprep.subr.mxu0 0.0
        %875 = vmatpush1.msra.mxu0 0.0
        %876 = vmatprep.mubr.f32.mxu0 0.0
        %877 = vmatmul.mubr.f32.gmra.mrb[0].mxu0 %v801
        %v878 = vpop.f32.mrb[0].mxu0
        %v879 = vadd.f32 0.0, %v878
        %v880 = vpop.f32.mrb[0].mxu0
        %v881 = vadd.f32 0.0, %v880
        %882 = vmatprep.mubr.f32.mxu0 0.0
        %883 = vmatmul.mubr.f32.gmra.mrb[0].mxu0 %v804
        %v884 = vpop.f32.mrb[0].mxu0
        %v885 = vadd.f32 0.0, %v884
        %v886 = vpop.f32.mrb[0].mxu0
        %v887 = vadd.f32 0.0, %v886
        %888 = vmatprep.mubr.f32.mxu0 0.0
        %889 = vmatmul.mubr.f32.gmra.mrb[0].mxu0 %v807
        %v890 = vpop.f32.mrb[0].mxu0
        %v891 = vadd.f32 0.0, %v890
        %v892 = vpop.f32.mrb[0].mxu0
        %v893 = vadd.f32 0.0, %v892
        %894 = vmatprep.mubr.f32.mxu0 0.0
        %895 = vmatmul.mubr.f32.gmra.mrb[0].mxu0 %v810
        %v896 = vpop.f32.mrb[0].mxu0
        %v897 = vadd.f32 0.0, %v896
        %v898 = vpop.f32.mrb[0].mxu0
        %v899 = vadd.f32 0.0, %v898
        %900 = vdwg.mxu0
        %v901 = vmax.f32 %v879, 0.0
        %v902 = vmax.f32 %v881, 0.0
        %v903 = vmax.f32 %v885, 0.0
        %v904 = vmax.f32 %v887, 0.0
        %v905 = vmax.f32 %v891, 0.0
        %v906 = vmax.f32 %v893, 0.0
        %v907 = vmax.f32 %v897, 0.0
        %v908 = vmax.f32 %v899, 0.0
        %909 = vst [vmem:[#allocation2] sm:$0xff] %v901
        %910 = vst [vmem:[#allocation2 + $0x8] sm:$0xff] %v902
        %911 = vst [vmem:[#allocation2 + $0x10] sm:$0xff] %v903
        %912 = vst [vmem:[#allocation2 + $0x18] sm:$0xff] %v904
        %913 = vst [vmem:[#allocation2 + $0x20] sm:$0xff] %v905
        %914 = vst [vmem:[#allocation2 + $0x28] sm:$0xff] %v906
        %915 = vst [vmem:[#allocation2 + $0x30] sm:$0xff] %v907
        %916 = vst [vmem:[#allocation2 + $0x38] sm:$0xff] %v908
        %v917 = vld [vmem:[#allocation3] sm:$0xff]
        %v918 = vld [vmem:[#allocation3 + $0x8] sm:$0xff]
        %v919 = vld [vmem:[#allocation3 + $0x10] sm:$0xff]
        %v920 = vld [vmem:[#allocation3 + $0x18] sm:$0xff]
        %v921 = vadd.f32 %v901, %v902
        %922 = vadd.xlane.f32.xlu0 %v921
        %v923 = vpop.xlane.xlu0 %922
        %v924 = vadd.f32 %v903, %v904
        %925 = vadd.xlane.f32.xlu0 %v924
        %v926 = vpop.xlane.xlu0 %925
        %v927 = vadd.f32 %v905, %v906
        %928 = vadd.xlane.f32.xlu0 %v927
        %v929 = vpop.xlane.xlu0 %928
        %v930 = vadd.f32 %v907, %v908
        %931 = vadd.xlane.f32.xlu0 %v930
        %v932 = vpop.xlane.xlu0 %931
        %v933 = vadd.f32 %v917, %v923
        %v934 = vadd.f32 %v918, %v926
        %v935 = vadd.f32 %v919, %v929
        %v936 = vadd.f32 %v920, %v932
        %vm937 = vcmask 7168
        %938 = vst.msk [vmem:[#allocation3] sm:$0xff] %vm937, %v933
        %939 = vst.msk [vmem:[#allocation3 + $0x8] sm:$0xff] %vm937, %v934
        %940 = vst.msk [vmem:[#allocation3 + $0x10] sm:$0xff] %vm937, %v935
        %941 = vst.msk [vmem:[#allocation3 + $0x18] sm:$0xff] %vm937, %v936
        %v942 = vld [vmem:[#allocation4] sm:$0xff]
        %v943 = vld [vmem:[#allocation4 + $0x8] sm:$0xff]
        %v944 = vld [vmem:[#allocation4 + $0x10] sm:$0xff]
        %v945 = vld [vmem:[#allocation4 + $0x18] sm:$0xff]
        %v946 = vmul.f32 %v901, %v901
        %v947 = vmul.f32 %v902, %v902
        %v948 = vmul.f32 %v903, %v903
        %v949 = vmul.f32 %v904, %v904
        %v950 = vmul.f32 %v905, %v905
        %v951 = vmul.f32 %v906, %v906
        %v952 = vmul.f32 %v907, %v907
        %v953 = vmul.f32 %v908, %v908
        %v954 = vadd.f32 %v946, %v947
        %955 = vadd.xlane.f32.xlu0 %v954
        %v956 = vpop.xlane.xlu0 %955
        %v957 = vadd.f32 %v948, %v949
        %958 = vadd.xlane.f32.xlu0 %v957
        %v959 = vpop.xlane.xlu0 %958
        %v960 = vadd.f32 %v950, %v951
        %961 = vadd.xlane.f32.xlu0 %v960
        %v962 = vpop.xlane.xlu0 %961
        %v963 = vadd.f32 %v952, %v953
        %964 = vadd.xlane.f32.xlu0 %v963
        %v965 = vpop.xlane.xlu0 %964
        %v966 = vadd.f32 %v942, %v956
        %v967 = vadd.f32 %v943, %v959
        %v968 = vadd.f32 %v944, %v962
        %v969 = vadd.f32 %v945, %v965
        %970 = vst.msk [vmem:[#allocation4] sm:$0xff] %vm937, %v966
        %971 = vst.msk [vmem:[#allocation4 + $0x8] sm:$0xff] %vm937, %v967
        %972 = vst.msk [vmem:[#allocation4 + $0x10] sm:$0xff] %vm937, %v968
        %973 = vst.msk [vmem:[#allocation4 + $0x18] sm:$0xff] %vm937, %v969
      $region60: #{tpu_custom_call.1} parent=47 // pred_fallthru
        _
      %p974 = scmp.eq.s32.totalorder %s22, 2
      // Predicated region
      $region65: #{tpu_custom_call.1} parent=47 // pred_check
        %p975 = pneg %p974
      $region66: #{tpu_custom_call.1} parent=47 // pred_check_branch
        %977 = sbr.rel (%p975) target = $region68
      $region67: #{tpu_custom_call.1} parent=47 // pred_region
        %p978 = scmp.eq.s32.totalorder %s23, 0
        // Predicated region
        $region69: #{tpu_custom_call.1} parent=67 // pred_check
          %p979 = pneg %p978
        $region70: #{tpu_custom_call.1} parent=67 // pred_check_branch
          %981 = sbr.rel (%p979) target = $region72
        $region71: #{tpu_custom_call.1} parent=67 // pred_region
          %v982 = vld [vmem:[#allocation3] sm:$0xff]
          %v983 = vld [vmem:[#allocation3 + $0x8] sm:$0xff]
          %v984 = vld [vmem:[#allocation3 + $0x10] sm:$0xff]
          %v985 = vld [vmem:[#allocation3 + $0x18] sm:$0xff]
          %v986 = vmul.f32 %v982, 0.00390625
          %v987 = vmul.f32 %v983, 0.00390625
          %v988 = vmul.f32 %v984, 0.00390625
          %v989 = vmul.f32 %v985, 0.00390625
          %v990 = vld [vmem:[#allocation4] sm:$0xff]
          %v991 = vld [vmem:[#allocation4 + $0x8] sm:$0xff]
          %v992 = vld [vmem:[#allocation4 + $0x10] sm:$0xff]
          %v993 = vld [vmem:[#allocation4 + $0x18] sm:$0xff]
          %v994 = vmul.f32 %v990, 0.00390625
          %v995 = vmul.f32 %v991, 0.00390625
          %v996 = vmul.f32 %v992, 0.00390625
          %v997 = vmul.f32 %v993, 0.00390625
          %v998 = vmul.f32 %v986, %v986
          %v999 = vmul.f32 %v987, %v987
          %v1000 = vmul.f32 %v988, %v988
          %v1001 = vmul.f32 %v989, %v989
          %v1002 = vsub.f32 %v994, %v998
          %v1003 = vsub.f32 %v995, %v999
          %v1004 = vsub.f32 %v996, %v1000
          %v1005 = vsub.f32 %v997, %v1001
          %v1006 = vmax.f32 %v1002, 0.0
          %v1007 = vmax.f32 %v1003, 0.0
          %v1008 = vmax.f32 %v1004, 0.0
          %v1009 = vmax.f32 %v1005, 0.0
          %v1010 = vadd.f32 %v1006, 1e-05
          %v1011 = vadd.f32 %v1007, 1e-05
          %v1012 = vadd.f32 %v1008, 1e-05
          %v1013 = vadd.f32 %v1009, 1e-05
          %v1014 = vrsqrt.pop %v1010
          %v1015 = vrsqrt.pop %v1011
          %v1016 = vrsqrt.pop %v1012
          %v1017 = vrsqrt.pop %v1013
          %s1018 = scalar_lea.vmem %s3, 32
          %v1019 = vld [vmem:[%s1018] sm:$0xff]
          %v1020 = vld [vmem:[%s1018 + $0x8] sm:$0xff]
          %v1021 = vld [vmem:[%s1018 + $0x10] sm:$0xff]
          %v1022 = vld [vmem:[%s1018 + $0x18] sm:$0xff]
          %v1023 = vmul.f32 %v1019, %v1014
          %v1024 = vmul.f32 %v1020, %v1015
          %v1025 = vmul.f32 %v1021, %v1016
          %v1026 = vmul.f32 %v1022, %v1017
          %vm1027 = vcmask 7168
          %1028 = vst.msk [vmem:[#allocation5] sm:$0xff] %vm1027, %v1023
          %1029 = vst.msk [vmem:[#allocation5 + $0x8] sm:$0xff] %vm1027, %v1024
          %1030 = vst.msk [vmem:[#allocation5 + $0x10] sm:$0xff] %vm1027, %v1025
          %1031 = vst.msk [vmem:[#allocation5 + $0x18] sm:$0xff] %vm1027, %v1026
          %s1032 = scalar_lea.vmem %s4, 32
          %v1033 = vld [vmem:[%s1032] sm:$0xff]
          %v1034 = vld [vmem:[%s1032 + $0x8] sm:$0xff]
          %v1035 = vld [vmem:[%s1032 + $0x10] sm:$0xff]
          %v1036 = vld [vmem:[%s1032 + $0x18] sm:$0xff]
          %v1037 = vmul.f32 %v986, %v1023
          %v1038 = vmul.f32 %v987, %v1024
          %v1039 = vmul.f32 %v988, %v1025
          %v1040 = vmul.f32 %v989, %v1026
          %v1041 = vsub.f32 %v1033, %v1037
          %v1042 = vsub.f32 %v1034, %v1038
          %v1043 = vsub.f32 %v1035, %v1039
          %v1044 = vsub.f32 %v1036, %v1040
          %1045 = vst.msk [vmem:[#allocation6] sm:$0xff] %vm1027, %v1041
          %1046 = vst.msk [vmem:[#allocation6 + $0x8] sm:$0xff] %vm1027, %v1042
          %1047 = vst.msk [vmem:[#allocation6 + $0x10] sm:$0xff] %vm1027, %v1043
          %1048 = vst.msk [vmem:[#allocation6 + $0x18] sm:$0xff] %vm1027, %v1044
        $region72: #{tpu_custom_call.1} parent=67 // pred_fallthru
          _
        %v1049 = vld [vmem:[#allocation2] sm:$0xff]
        %v1050 = vld [vmem:[#allocation2 + $0x8] sm:$0xff]
        %v1051 = vld [vmem:[#allocation2 + $0x10] sm:$0xff]
        %v1052 = vld [vmem:[#allocation2 + $0x18] sm:$0xff]
        %v1053 = vld [vmem:[#allocation2 + $0x20] sm:$0xff]
        %v1054 = vld [vmem:[#allocation2 + $0x28] sm:$0xff]
        %v1055 = vld [vmem:[#allocation2 + $0x30] sm:$0xff]
        %v1056 = vld [vmem:[#allocation2 + $0x38] sm:$0xff]
        %v1057 = vld [vmem:[#allocation5] sm:$0xff]
        %v1058 = vld [vmem:[#allocation5 + $0x8] sm:$0xff]
        %v1059 = vld [vmem:[#allocation5 + $0x10] sm:$0xff]
        %v1060 = vld [vmem:[#allocation5 + $0x18] sm:$0xff]
        %1062 = vset.pattern.permute.xlu0 0
        %1063 = vperm.xlu0 %1062, %v1057
        %v1064 = vpop.permute.xlu0 %1063
        %1067 = vset.pattern.permute.xlu0 0
        %1068 = vperm.xlu0 %1067, %v1058
        %v1069 = vpop.permute.xlu0 %1068
        %1072 = vset.pattern.permute.xlu0 0
        %1073 = vperm.xlu0 %1072, %v1059
        %v1074 = vpop.permute.xlu0 %1073
        %1077 = vset.pattern.permute.xlu0 0
        %1078 = vperm.xlu0 %1077, %v1060
        %v1079 = vpop.permute.xlu0 %1078
        %v1081 = vmul.f32 %v1049, %v1064
        %v1082 = vmul.f32 %v1050, %v1064
        %v1083 = vmul.f32 %v1051, %v1069
        %v1084 = vmul.f32 %v1052, %v1069
        %v1085 = vmul.f32 %v1053, %v1074
        %v1086 = vmul.f32 %v1054, %v1074
        %v1087 = vmul.f32 %v1055, %v1079
        %v1088 = vmul.f32 %v1056, %v1079
        %v1089 = vld [vmem:[#allocation6] sm:$0xff]
        %v1090 = vld [vmem:[#allocation6 + $0x8] sm:$0xff]
        %v1091 = vld [vmem:[#allocation6 + $0x10] sm:$0xff]
        %v1092 = vld [vmem:[#allocation6 + $0x18] sm:$0xff]
        %1094 = vset.pattern.permute.xlu0 0
        %1095 = vperm.xlu0 %1094, %v1089
        %v1096 = vpop.permute.xlu0 %1095
        %1099 = vset.pattern.permute.xlu0 0
        %1100 = vperm.xlu0 %1099, %v1090
        %v1101 = vpop.permute.xlu0 %1100
        %1104 = vset.pattern.permute.xlu0 0
        %1105 = vperm.xlu0 %1104, %v1091
        %v1106 = vpop.permute.xlu0 %1105
        %1109 = vset.pattern.permute.xlu0 0
        %1110 = vperm.xlu0 %1109, %v1092
        %v1111 = vpop.permute.xlu0 %1110
        %v1113 = vadd.f32 %v1081, %v1096
        %v1114 = vadd.f32 %v1082, %v1096
        %v1115 = vadd.f32 %v1083, %v1101
        %v1116 = vadd.f32 %v1084, %v1101
        %v1117 = vadd.f32 %v1085, %v1106
        %v1118 = vadd.f32 %v1086, %v1106
        %v1119 = vadd.f32 %v1087, %v1111
        %v1120 = vadd.f32 %v1088, %v1111
        %v1121 = vld [vmem:[%s5] sm:$0xff]
        %v1122 = vld [vmem:[%s6] sm:$0x1]
        %v1124 = vlaneseq
        %v1125 = vshrl.u32 %v1124, 7
        %v1126 = vsub.s32 0, %v1125
        %v1127 = vrot.slane %v1122, %v1126
        %1129 = vxpose.xlu0.b32.start [1/16] %v1113, 128
        %1130 = vxpose.xlu0.b32.cont [2/16] %v1115, 128
        %1131 = vxpose.xlu0.b32.cont [3/16] %v1117, 128
        %1132 = vxpose.xlu0.b32.cont [4/16] %v1119, 128
        %1133 = vxpose.xlu0.b32.cont [5/16] 0.0, 128
        %1134 = vxpose.xlu0.b32.cont [6/16] 0.0, 128
        %1135 = vxpose.xlu0.b32.cont [7/16] 0.0, 128
        %1136 = vxpose.xlu0.b32.cont [8/16] 0.0, 128
        %1137 = vxpose.xlu0.b32.cont [9/16] 0.0, 128
        %1138 = vxpose.xlu0.b32.cont [10/16] 0.0, 128
        %1139 = vxpose.xlu0.b32.cont [11/16] 0.0, 128
        %1140 = vxpose.xlu0.b32.cont [12/16] 0.0, 128
        %1141 = vxpose.xlu0.b32.cont [13/16] 0.0, 128
        %1142 = vxpose.xlu0.b32.cont [14/16] 0.0, 128
        %1143 = vxpose.xlu0.b32.cont [15/16] 0.0, 128
        %1144 = vxpose.xlu0.b32.end [16/16] 0.0, 128
        %v1145 = vpop.trf.xlu0
        %v1146 = vpop.trf.xlu0
        %v1147 = vpop.trf.xlu0
        %v1148 = vpop.trf.xlu0
        %v1149 = vpop.trf.xlu0
        %v1150 = vpop.trf.xlu0
        %v1151 = vpop.trf.xlu0
        %v1152 = vpop.trf.xlu0
        %v1153 = vpop.trf.xlu0
        %v1154 = vpop.trf.xlu0
        %v1155 = vpop.trf.xlu0
        %v1156 = vpop.trf.xlu0
        %v1157 = vpop.trf.xlu0
        %v1158 = vpop.trf.xlu0
        %v1159 = vpop.trf.xlu0
        %v1160 = vpop.trf.xlu0
        %1161 = vxpose.xlu0.b32.start [1/16] %v1114, 128
        %1162 = vxpose.xlu0.b32.cont [2/16] %v1116, 128
        %1163 = vxpose.xlu0.b32.cont [3/16] %v1118, 128
        %1164 = vxpose.xlu0.b32.cont [4/16] %v1120, 128
        %1165 = vxpose.xlu0.b32.cont [5/16] 0.0, 128
        %1166 = vxpose.xlu0.b32.cont [6/16] 0.0, 128
        %1167 = vxpose.xlu0.b32.cont [7/16] 0.0, 128
        %1168 = vxpose.xlu0.b32.cont [8/16] 0.0, 128
        %1169 = vxpose.xlu0.b32.cont [9/16] 0.0, 128
        %1170 = vxpose.xlu0.b32.cont [10/16] 0.0, 128
        %1171 = vxpose.xlu0.b32.cont [11/16] 0.0, 128
        %1172 = vxpose.xlu0.b32.cont [12/16] 0.0, 128
        %1173 = vxpose.xlu0.b32.cont [13/16] 0.0, 128
        %1174 = vxpose.xlu0.b32.cont [14/16] 0.0, 128
        %1175 = vxpose.xlu0.b32.cont [15/16] 0.0, 128
        %1176 = vxpose.xlu0.b32.end [16/16] 0.0, 128
        %v1177 = vpop.trf.xlu0
        %v1178 = vpop.trf.xlu0
        %v1179 = vpop.trf.xlu0
        %v1180 = vpop.trf.xlu0
        %v1181 = vpop.trf.xlu0
        %v1182 = vpop.trf.xlu0
        %v1183 = vpop.trf.xlu0
        %v1184 = vpop.trf.xlu0
        %v1185 = vpop.trf.xlu0
        %v1186 = vpop.trf.xlu0
        %v1187 = vpop.trf.xlu0
        %v1188 = vpop.trf.xlu0
        %v1189 = vpop.trf.xlu0
        %v1190 = vpop.trf.xlu0
        %v1191 = vpop.trf.xlu0
        %v1192 = vpop.trf.xlu0
        %vm1193 = vcmask 261120
        %v1195 = vsel %vm1193, %v1145, 0
        %v1198 = vsel %vm1193, %v1146, 0
        %v1201 = vsel %vm1193, %v1147, 0
        %v1204 = vsel %vm1193, %v1148, 0
        %v1207 = vsel %vm1193, %v1149, 0
        %v1210 = vsel %vm1193, %v1150, 0
        %v1213 = vsel %vm1193, %v1151, 0
        %v1216 = vsel %vm1193, %v1152, 0
        %v1219 = vsel %vm1193, %v1153, 0
        %v1222 = vsel %vm1193, %v1154, 0
        %v1225 = vsel %vm1193, %v1155, 0
        %v1228 = vsel %vm1193, %v1156, 0
        %v1231 = vsel %vm1193, %v1157, 0
        %v1234 = vsel %vm1193, %v1158, 0
        %v1237 = vsel %vm1193, %v1159, 0
        %v1240 = vsel %vm1193, %v1160, 0
        %v1243 = vsel %vm1193, %v1177, 0
        %v1246 = vsel %vm1193, %v1178, 0
        %v1249 = vsel %vm1193, %v1179, 0
        %v1252 = vsel %vm1193, %v1180, 0
        %v1255 = vsel %vm1193, %v1181, 0
        %v1258 = vsel %vm1193, %v1182, 0
        %v1261 = vsel %vm1193, %v1183, 0
        %v1264 = vsel %vm1193, %v1184, 0
        %v1267 = vsel %vm1193, %v1185, 0
        %v1270 = vsel %vm1193, %v1186, 0
        %v1273 = vsel %vm1193, %v1187, 0
        %v1276 = vsel %vm1193, %v1188, 0
        %v1279 = vsel %vm1193, %v1189, 0
        %v1282 = vsel %vm1193, %v1190, 0
        %v1285 = vsel %vm1193, %v1191, 0
        %v1288 = vsel %vm1193, %v1192, 0
        %v1291 = vsel %vm1193, %v1121, 0
        %1293 = vmatprep.subr.mxu0 0.0
        %1294 = vmatpush1.xpose.msra.mxu0 %v1291
        %1295 = vmatprep.subr.mxu0 0.0
        %1296 = vmatpush1.xpose.msra.mxu0 0.0
        %1297 = vmatprep.subr.mxu0 0.0
        %1298 = vmatpush1.xpose.msra.mxu0 0.0
        %1299 = vmatprep.subr.mxu0 0.0
        %1300 = vmatpush1.xpose.msra.mxu0 0.0
        %1301 = vmatprep.subr.mxu0 0.0
        %1302 = vmatpush1.xpose.msra.mxu0 0.0
        %1303 = vmatprep.subr.mxu0 0.0
        %1304 = vmatpush1.xpose.msra.mxu0 0.0
        %1305 = vmatprep.subr.mxu0 0.0
        %1306 = vmatpush1.xpose.msra.mxu0 0.0
        %1307 = vmatprep.subr.mxu0 0.0
        %1308 = vmatpush1.xpose.msra.mxu0 0.0
        %1309 = vmatprep.subr.mxu0 0.0
        %1310 = vmatpush1.xpose.msra.mxu0 0.0
        %1311 = vmatprep.subr.mxu0 0.0
        %1312 = vmatpush1.xpose.msra.mxu0 0.0
        %1313 = vmatprep.subr.mxu0 0.0
        %1314 = vmatpush1.xpose.msra.mxu0 0.0
        %1315 = vmatprep.subr.mxu0 0.0
        %1316 = vmatpush1.xpose.msra.mxu0 0.0
        %1317 = vmatprep.subr.mxu0 0.0
        %1318 = vmatpush1.xpose.msra.mxu0 0.0
        %1319 = vmatprep.subr.mxu0 0.0
        %1320 = vmatpush1.xpose.msra.mxu0 0.0
        %1321 = vmatprep.subr.mxu0 0.0
        %1322 = vmatpush1.xpose.msra.mxu0 0.0
        %1323 = vmatprep.subr.mxu0 0.0
        %1324 = vmatpush1.xpose.msra.mxu0 0.0
        %1325 = vmatprep.subr.mxu0 0.0
        %1326 = vmatpush1.xpose.msra.mxu0 0.0
        %1327 = vmatprep.subr.mxu0 0.0
        %1328 = vmatpush1.xpose.msra.mxu0 0.0
        %1329 = vmatprep.subr.mxu0 0.0
        %1330 = vmatpush1.xpose.msra.mxu0 0.0
        %1331 = vmatprep.subr.mxu0 0.0
        %1332 = vmatpush1.xpose.msra.mxu0 0.0
        %1333 = vmatprep.subr.mxu0 0.0
        %1334 = vmatpush1.xpose.msra.mxu0 0.0
        %1335 = vmatprep.subr.mxu0 0.0
        %1336 = vmatpush1.xpose.msra.mxu0 0.0
        %1337 = vmatprep.subr.mxu0 0.0
        %1338 = vmatpush1.xpose.msra.mxu0 0.0
        %1339 = vmatprep.subr.mxu0 0.0
        %1340 = vmatpush1.xpose.msra.mxu0 0.0
        %1341 = vmatprep.subr.mxu0 0.0
        %1342 = vmatpush1.xpose.msra.mxu0 0.0
        %1343 = vmatprep.subr.mxu0 0.0
        %1344 = vmatpush1.xpose.msra.mxu0 0.0
        %1345 = vmatprep.subr.mxu0 0.0
        %1346 = vmatpush1.xpose.msra.mxu0 0.0
        %1347 = vmatprep.subr.mxu0 0.0
        %1348 = vmatpush1.xpose.msra.mxu0 0.0
        %1349 = vmatprep.subr.mxu0 0.0
        %1350 = vmatpush1.xpose.msra.mxu0 0.0
        %1351 = vmatprep.subr.mxu0 0.0
        %1352 = vmatpush1.xpose.msra.mxu0 0.0
        %1353 = vmatprep.subr.mxu0 0.0
        %1354 = vmatpush1.xpose.msra.mxu0 0.0
        %1355 = vmatprep.subr.mxu0 0.0
        %1356 = vmatpush1.xpose.msra.mxu0 0.0
        %1357 = vmatprep.mubr.f32.mxu0 0.0
        %1358 = vmatmul.mubr.f32.gmra.mrb[0].mxu0 %v1195
        %v1359 = vpop.f32.mrb[0].mxu0
        %v1360 = vadd.f32 %v1127, %v1359
        %v1361 = vpop.f32.mrb[0].mxu0
        %1362 = vmatprep.mubr.f32.mxu0 0.0
        %1363 = vmatmul.mubr.f32.gmra.mrb[0].mxu0 %v1198
        %v1364 = vpop.f32.mrb[0].mxu0
        %v1365 = vadd.f32 %v1127, %v1364
        %v1366 = vpop.f32.mrb[0].mxu0
        %1367 = vmatprep.mubr.f32.mxu0 0.0
        %1368 = vmatmul.mubr.f32.gmra.mrb[0].mxu0 %v1201
        %v1369 = vpop.f32.mrb[0].mxu0
        %v1370 = vadd.f32 %v1127, %v1369
        %v1371 = vpop.f32.mrb[0].mxu0
        %1372 = vmatprep.mubr.f32.mxu0 0.0
        %1373 = vmatmul.mubr.f32.gmra.mrb[0].mxu0 %v1204
        %v1374 = vpop.f32.mrb[0].mxu0
        %v1375 = vadd.f32 %v1127, %v1374
        %v1376 = vpop.f32.mrb[0].mxu0
        %1377 = vmatprep.mubr.f32.mxu0 0.0
        %1378 = vmatmul.mubr.f32.gmra.mrb[0].mxu0 %v1207
        %v1379 = vpop.f32.mrb[0].mxu0
        %v1380 = vadd.f32 %v1127, %v1379
        %v1381 = vpop.f32.mrb[0].mxu0
        %1382 = vmatprep.mubr.f32.mxu0 0.0
        %1383 = vmatmul.mubr.f32.gmra.mrb[0].mxu0 %v1210
        %v1384 = vpop.f32.mrb[0].mxu0
        %v1385 = vadd.f32 %v1127, %v1384
        %v1386 = vpop.f32.mrb[0].mxu0
        %1387 = vmatprep.mubr.f32.mxu0 0.0
        %1388 = vmatmul.mubr.f32.gmra.mrb[0].mxu0 %v1213
        %v1389 = vpop.f32.mrb[0].mxu0
        %v1390 = vadd.f32 %v1127, %v1389
        %v1391 = vpop.f32.mrb[0].mxu0
        %1392 = vmatprep.mubr.f32.mxu0 0.0
        %1393 = vmatmul.mubr.f32.gmra.mrb[0].mxu0 %v1216
        %v1394 = vpop.f32.mrb[0].mxu0
        %v1395 = vadd.f32 %v1127, %v1394
        %v1396 = vpop.f32.mrb[0].mxu0
        %1397 = vmatprep.mubr.f32.mxu0 0.0
        %1398 = vmatmul.mubr.f32.gmra.mrb[0].mxu0 %v1219
        %v1399 = vpop.f32.mrb[0].mxu0
        %v1400 = vadd.f32 %v1127, %v1399
        %v1401 = vpop.f32.mrb[0].mxu0
        %1402 = vmatprep.mubr.f32.mxu0 0.0
        %1403 = vmatmul.mubr.f32.gmra.mrb[0].mxu0 %v1222
        %v1404 = vpop.f32.mrb[0].mxu0
        %v1405 = vadd.f32 %v1127, %v1404
        %v1406 = vpop.f32.mrb[0].mxu0
        %1407 = vmatprep.mubr.f32.mxu0 0.0
        %1408 = vmatmul.mubr.f32.gmra.mrb[0].mxu0 %v1225
        %v1409 = vpop.f32.mrb[0].mxu0
        %v1410 = vadd.f32 %v1127, %v1409
        %v1411 = vpop.f32.mrb[0].mxu0
        %1412 = vmatprep.mubr.f32.mxu0 0.0
        %1413 = vmatmul.mubr.f32.gmra.mrb[0].mxu0 %v1228
        %v1414 = vpop.f32.mrb[0].mxu0
        %v1415 = vadd.f32 %v1127, %v1414
        %v1416 = vpop.f32.mrb[0].mxu0
        %1417 = vmatprep.mubr.f32.mxu0 0.0
        %1418 = vmatmul.mubr.f32.gmra.mrb[0].mxu0 %v1231
        %v1419 = vpop.f32.mrb[0].mxu0
        %v1420 = vadd.f32 %v1127, %v1419
        %v1421 = vpop.f32.mrb[0].mxu0
        %1422 = vmatprep.mubr.f32.mxu0 0.0
        %1423 = vmatmul.mubr.f32.gmra.mrb[0].mxu0 %v1234
        %v1424 = vpop.f32.mrb[0].mxu0
        %v1425 = vadd.f32 %v1127, %v1424
        %v1426 = vpop.f32.mrb[0].mxu0
        %1427 = vmatprep.mubr.f32.mxu0 0.0
        %1428 = vmatmul.mubr.f32.gmra.mrb[0].mxu0 %v1237
        %v1429 = vpop.f32.mrb[0].mxu0
        %v1430 = vadd.f32 %v1127, %v1429
        %v1431 = vpop.f32.mrb[0].mxu0
        %1432 = vmatprep.mubr.f32.mxu0 0.0
        %1433 = vmatmul.mubr.f32.gmra.mrb[0].mxu0 %v1240
        %v1434 = vpop.f32.mrb[0].mxu0
        %v1435 = vadd.f32 %v1127, %v1434
        %v1436 = vpop.f32.mrb[0].mxu0
        %1437 = vmatprep.mubr.f32.mxu0 0.0
        %1438 = vmatmul.mubr.f32.gmra.mrb[0].mxu0 %v1243
        %v1439 = vpop.f32.mrb[0].mxu0
        %v1440 = vadd.f32 %v1127, %v1439
        %v1441 = vpop.f32.mrb[0].mxu0
        %1442 = vmatprep.mubr.f32.mxu0 0.0
        %1443 = vmatmul.mubr.f32.gmra.mrb[0].mxu0 %v1246
        %v1444 = vpop.f32.mrb[0].mxu0
        %v1445 = vadd.f32 %v1127, %v1444
        %v1446 = vpop.f32.mrb[0].mxu0
        %1447 = vmatprep.mubr.f32.mxu0 0.0
        %1448 = vmatmul.mubr.f32.gmra.mrb[0].mxu0 %v1249
        %v1449 = vpop.f32.mrb[0].mxu0
        %v1450 = vadd.f32 %v1127, %v1449
        %v1451 = vpop.f32.mrb[0].mxu0
        %1452 = vmatprep.mubr.f32.mxu0 0.0
        %1453 = vmatmul.mubr.f32.gmra.mrb[0].mxu0 %v1252
        %v1454 = vpop.f32.mrb[0].mxu0
        %v1455 = vadd.f32 %v1127, %v1454
        %v1456 = vpop.f32.mrb[0].mxu0
        %1457 = vmatprep.mubr.f32.mxu0 0.0
        %1458 = vmatmul.mubr.f32.gmra.mrb[0].mxu0 %v1255
        %v1459 = vpop.f32.mrb[0].mxu0
        %v1460 = vadd.f32 %v1127, %v1459
        %v1461 = vpop.f32.mrb[0].mxu0
        %1462 = vmatprep.mubr.f32.mxu0 0.0
        %1463 = vmatmul.mubr.f32.gmra.mrb[0].mxu0 %v1258
        %v1464 = vpop.f32.mrb[0].mxu0
        %v1465 = vadd.f32 %v1127, %v1464
        %v1466 = vpop.f32.mrb[0].mxu0
        %1467 = vmatprep.mubr.f32.mxu0 0.0
        %1468 = vmatmul.mubr.f32.gmra.mrb[0].mxu0 %v1261
        %v1469 = vpop.f32.mrb[0].mxu0
        %v1470 = vadd.f32 %v1127, %v1469
        %v1471 = vpop.f32.mrb[0].mxu0
        %1472 = vmatprep.mubr.f32.mxu0 0.0
        %1473 = vmatmul.mubr.f32.gmra.mrb[0].mxu0 %v1264
        %v1474 = vpop.f32.mrb[0].mxu0
        %v1475 = vadd.f32 %v1127, %v1474
        %v1476 = vpop.f32.mrb[0].mxu0
        %1477 = vmatprep.mubr.f32.mxu0 0.0
        %1478 = vmatmul.mubr.f32.gmra.mrb[0].mxu0 %v1267
        %v1479 = vpop.f32.mrb[0].mxu0
        %v1480 = vadd.f32 %v1127, %v1479
        %v1481 = vpop.f32.mrb[0].mxu0
        %1482 = vmatprep.mubr.f32.mxu0 0.0
        %1483 = vmatmul.mubr.f32.gmra.mrb[0].mxu0 %v1270
        %v1484 = vpop.f32.mrb[0].mxu0
        %v1485 = vadd.f32 %v1127, %v1484
        %v1486 = vpop.f32.mrb[0].mxu0
        %1487 = vmatprep.mubr.f32.mxu0 0.0
        %1488 = vmatmul.mubr.f32.gmra.mrb[0].mxu0 %v1273
        %v1489 = vpop.f32.mrb[0].mxu0
        %v1490 = vadd.f32 %v1127, %v1489
        %v1491 = vpop.f32.mrb[0].mxu0
        %1492 = vmatprep.mubr.f32.mxu0 0.0
        %1493 = vmatmul.mubr.f32.gmra.mrb[0].mxu0 %v1276
        %v1494 = vpop.f32.mrb[0].mxu0
        %v1495 = vadd.f32 %v1127, %v1494
        %v1496 = vpop.f32.mrb[0].mxu0
        %1497 = vmatprep.mubr.f32.mxu0 0.0
        %1498 = vmatmul.mubr.f32.gmra.mrb[0].mxu0 %v1279
        %v1499 = vpop.f32.mrb[0].mxu0
        %v1500 = vadd.f32 %v1127, %v1499
        %v1501 = vpop.f32.mrb[0].mxu0
        %1502 = vmatprep.mubr.f32.mxu0 0.0
        %1503 = vmatmul.mubr.f32.gmra.mrb[0].mxu0 %v1282
        %v1504 = vpop.f32.mrb[0].mxu0
        %v1505 = vadd.f32 %v1127, %v1504
        %v1506 = vpop.f32.mrb[0].mxu0
        %1507 = vmatprep.mubr.f32.mxu0 0.0
        %1508 = vmatmul.mubr.f32.gmra.mrb[0].mxu0 %v1285
        %v1509 = vpop.f32.mrb[0].mxu0
        %v1510 = vadd.f32 %v1127, %v1509
        %v1511 = vpop.f32.mrb[0].mxu0
        %1512 = vmatprep.mubr.f32.mxu0 0.0
        %1513 = vmatmul.mubr.f32.gmra.mrb[0].mxu0 %v1288
        %v1514 = vpop.f32.mrb[0].mxu0
        %v1515 = vadd.f32 %v1127, %v1514
        %v1516 = vpop.f32.mrb[0].mxu0
        %1517 = vdwg.mxu0
        %vm1518 = vcmask 64512
        %1519 = vst.msk [vmem:[%s314] sm:$0xff] %vm1518, %v1360
        %1520 = vst.msk [vmem:[%s314 + $0x8] sm:$0xff] %vm1518, %v1365
        %1521 = vst.msk [vmem:[%s314 + $0x10] sm:$0xff] %vm1518, %v1370
        %1522 = vst.msk [vmem:[%s314 + $0x18] sm:$0xff] %vm1518, %v1375
        %1523 = vst.msk [vmem:[%s314 + $0x20] sm:$0xff] %vm1518, %v1380
        %1524 = vst.msk [vmem:[%s314 + $0x28] sm:$0xff] %vm1518, %v1385
        %1525 = vst.msk [vmem:[%s314 + $0x30] sm:$0xff] %vm1518, %v1390
        %1526 = vst.msk [vmem:[%s314 + $0x38] sm:$0xff] %vm1518, %v1395
        %1527 = vst.msk [vmem:[%s314 + $0x40] sm:$0xff] %vm1518, %v1400
        %1528 = vst.msk [vmem:[%s314 + $0x48] sm:$0xff] %vm1518, %v1405
        %1529 = vst.msk [vmem:[%s314 + $0x50] sm:$0xff] %vm1518, %v1410
        %1530 = vst.msk [vmem:[%s314 + $0x58] sm:$0xff] %vm1518, %v1415
        %1531 = vst.msk [vmem:[%s314 + $0x60] sm:$0xff] %vm1518, %v1420
        %1532 = vst.msk [vmem:[%s314 + $0x68] sm:$0xff] %vm1518, %v1425
        %1533 = vst.msk [vmem:[%s314 + $0x70] sm:$0xff] %vm1518, %v1430
        %1534 = vst.msk [vmem:[%s314 + $0x78] sm:$0xff] %vm1518, %v1435
        %1535 = vst.msk [vmem:[%s314 + $0x80] sm:$0xff] %vm1518, %v1440
        %1536 = vst.msk [vmem:[%s314 + $0x88] sm:$0xff] %vm1518, %v1445
        %1537 = vst.msk [vmem:[%s314 + $0x90] sm:$0xff] %vm1518, %v1450
        %1538 = vst.msk [vmem:[%s314 + $0x98] sm:$0xff] %vm1518, %v1455
        %1539 = vst.msk [vmem:[%s314 + $0xa0] sm:$0xff] %vm1518, %v1460
        %1540 = vst.msk [vmem:[%s314 + $0xa8] sm:$0xff] %vm1518, %v1465
        %1541 = vst.msk [vmem:[%s314 + $0xb0] sm:$0xff] %vm1518, %v1470
        %1542 = vst.msk [vmem:[%s314 + $0xb8] sm:$0xff] %vm1518, %v1475
        %1543 = vst.msk [vmem:[%s314 + $0xc0] sm:$0xff] %vm1518, %v1480
        %1544 = vst.msk [vmem:[%s314 + $0xc8] sm:$0xff] %vm1518, %v1485
        %1545 = vst.msk [vmem:[%s314 + $0xd0] sm:$0xff] %vm1518, %v1490
        %1546 = vst.msk [vmem:[%s314 + $0xd8] sm:$0xff] %vm1518, %v1495
        %1547 = vst.msk [vmem:[%s314 + $0xe0] sm:$0xff] %vm1518, %v1500
        %1548 = vst.msk [vmem:[%s314 + $0xe8] sm:$0xff] %vm1518, %v1505
        %1549 = vst.msk [vmem:[%s314 + $0xf0] sm:$0xff] %vm1518, %v1510
        %1550 = vst.msk [vmem:[%s314 + $0xf8] sm:$0xff] %vm1518, %v1515
      $region68: #{tpu_custom_call.1} parent=47 // pred_fallthru
        _
      %p1551 = scmp.eq.s32.totalorder %s22, 2
      %s1552 = scalar_select %p1551, %s23, 0
      %s1553 = smul.u32 32, %s1552
      %p1554 = scmp.lt.s32.totalorder %s1553, 31
      %s1555 = scalar_select %p1554, %s1553, 31
      %s1556 = smul.addr %s1555, 8
      %s1557 = scalar_lea.vmem %s7, %s1556
      // Predicated region
      $region73: #{tpu_custom_call.1} parent=47 // pred_check
        %p1558 = pneg %p208
      $region74: #{tpu_custom_call.1} parent=47 // pred_check_branch
        %1560 = sbr.rel (%p1558) target = $region76
      $region75: #{tpu_custom_call.1} parent=47 // pred_region
        %p1561 = scmp.eq.s32.totalorder %s22, 2
        %s1562 = scalar_select %p1561, %s23, 0
        %s1563 = smul.u32 32, %s1562
      $region76: #{tpu_custom_call.1} parent=47 // pred_fallthru
        _
    $region48: #{tpu_custom_call.1} parent=5 // pred_fallthru
      _
    %p1564 = scmp.le.s32.totalorder 2, %s13
    // Predicated region
    $region77: #{tpu_custom_call.1} parent=5 // pred_check
      %p1565 = pneg %p1564
    $region78: #{tpu_custom_call.1} parent=5 // pred_check_branch
      %1567 = sbr.rel (%p1565) target = $region80
    $region79: #{tpu_custom_call.1} parent=5 // pred_region
      %s1568 = ssub.s32 %s13, 2
      // Predicated region
      $region81: #{tpu_custom_call.1} parent=79 // pred_check
        %p1569 = pneg %p214
      $region82: #{tpu_custom_call.1} parent=79 // pred_check_branch
        %1571 = sbr.rel (%p1569) target = $region84
      $region83: #{tpu_custom_call.1} parent=79 // pred_region
        %p1572 = scmp.eq.s32.totalorder %s24, 2
        %s1573 = scalar_select %p1572, %s25, 0
        %s1574 = smul.u32 32, %s1573
        %p1575 = scmp.lt.s32.totalorder %s1574, 31
        %s1576 = scalar_select %p1575, %s1574, 31
        %s1577 = smul.addr %s1576, 8
        %s1578 = scalar_lea.vmem %s7, %s1577
      $region84: #{tpu_custom_call.1} parent=79 // pred_fallthru
        _
    $region80: #{tpu_custom_call.1} parent=5 // pred_fallthru
      _
  $region6: #{tpu_custom_call.1} parent=0 // loop_footer
    %s17 = sadd.s32 1, %s13
  $region7: #{tpu_custom_call.1} parent=0 // loop_footer_branch
    %12 = sbr.rel target = $region3
  $region8: #{tpu_custom_call.1} parent=0 // loop_exit
    _

</llo_original>
